<compile_context>
chip_gen: v7x
topology: tpu7x:2x2x1
jax: 0.10.0
libtpu: 0.0.40
codegen_flags: <defaults>
</compile_context>

<pallas_src>
import jax
import jax.numpy as jnp
from jax import lax
from jax.experimental import pallas as pl
from jax.experimental.pallas import tpu as pltpu

BN_EPS = 1e-5


def _pick_d_tile(d, hw, max_rows=1024):
  """Largest divisor TD of d such that TD*hw <= max_rows (fallback 1)."""
  best = 1
  for td in range(1, d + 1):
    if d % td == 0 and td * hw <= max_rows:
      best = td
  return best


def conv_block_pallas(x_ncdhw, weight, bias, gamma, beta):
  """x_ncdhw: (N, Cin, D, H, W); weight: (Cout, Cin, KD, KH, KW) (PyTorch layouts).

  `bias` is accepted for interface parity but intentionally unused in the kernel: a
  per-channel constant added before train-mode BatchNorm cancels exactly in the mean
  subtraction, so the forward output is mathematically identical without it.
  """
  del bias
  N, Cin, D, H, W = x_ncdhw.shape
  Cout, _, KD, KH, KW = weight.shape
  assert KD % 2 == 1 and KH % 2 == 1 and KW % 2 == 1, "padding='same' needs odd kernels"

  pd, ph, pw = KD // 2, KH // 2, KW // 2
  HW = H * W
  KC = KH * KW * Cin                 # KH/KW taps folded into the channel axis (36 here)

  TD = _pick_d_tile(D, HW)           # D-tile (halo tiling along D)
  n_dt = D // TD
  TDP = TD + KD - 1                  # D-tile + halo planes
  TM = TD * HW                       # output rows per grid step
  M = N * D * HW
  assert TM % 8 == 0, "TD*H*W must be a multiple of 8 (sublane granule)"

  # -------- host glue (bf16): layout change, pad, KH/KW unfold, D-halo tiles ----------
  xl = jnp.transpose(x_ncdhw, (0, 2, 3, 4, 1)).astype(jnp.bfloat16)       # NDHWC
  xp = jnp.pad(xl, ((0, 0), (pd, pd), (ph, ph), (pw, pw), (0, 0)))        # (N,Dp,Hp,Wp,Cin)
  # Fold the KH and KW taps into channels (order kh-major, kw, ci-minor to match wf):
  #   xw[n, d, h, w, (kh*KW + kw)*Cin + ci] = xp[n, d, h+kh, w+kw, ci]
  xw = jnp.concatenate(
      [xp[:, :, kh:kh + H, kw:kw + W, :] for kh in range(KH) for kw in range(KW)],
      axis=-1)                                                            # (N,Dp,H,W,KC)
  xw = xw.reshape(N, D + KD - 1, HW, KC)       # H*W becomes the sublane axis, KC lanes
  if n_dt == 1:
    xt = xw[:, None]                                                      # (N,1,TDP,HW,KC)
  else:
    # D-halo tiles overlap by KD-1 planes.  (A manual-DMA window fetch with
    # memory_space=pl.ANY would avoid this host-side copy for n_dt > 1; at the shapes
    # used here n_dt == 1, so this branch — and the copy — never runs.)
    xt = jnp.stack([xw[:, t * TD:t * TD + TDP] for t in range(n_dt)], axis=1)

  # Folded weight: (KD, KH*KW*Cin, Cout); row order (kh, kw, ci) matches xw above.
  wf = jnp.transpose(weight, (2, 3, 4, 1, 0)).reshape(KD, KC, Cout).astype(jnp.bfloat16)

  # -------- single Pallas pass: conv (bf16 store) + per-tile BN partial stats ---------
  def conv_stats_kernel(x_ref, w_ref, conv_ref, stats_ref):
    acc = jnp.zeros((TM, Cout), jnp.float32)
    for kd in range(KD):                                   # unrolled: KD small MXU matmuls
      lhs = x_ref[kd:kd + TD].reshape(TM, KC)              # free reshape (HW = sublanes)
      acc += jnp.dot(lhs, w_ref[kd], preferred_element_type=jnp.float32)
    conv_ref[...] = acc.astype(conv_ref.dtype)             # bf16 store, no channel padding
    # Per-tile BN partials from the f32 accumulator: (mean, M2); merged globally below.
    mean_t = jnp.sum(acc, axis=0, keepdims=True) * (1.0 / TM)
    dev = acc - mean_t
    m2_t = jnp.sum(dev * dev, axis=0, keepdims=True)
    stats_ref[...] = jnp.concatenate([mean_t, m2_t], axis=0)   # (2, Cout)

  conv_flat, stats = pl.pallas_call(
      conv_stats_kernel,
      out_shape=(jax.ShapeDtypeStruct((M, Cout), jnp.bfloat16),
                 jax.ShapeDtypeStruct((N, n_dt, 2, Cout), jnp.float32)),
      grid_spec=pltpu.PrefetchScalarGridSpec(
          num_scalar_prefetch=0,
          grid=(N, n_dt),
          in_specs=[
              pl.BlockSpec((None, None, TDP, HW, KC), lambda n, t: (n, t, 0, 0, 0)),
              pl.BlockSpec((KD, KC, Cout), lambda n, t: (0, 0, 0)),
          ],
          out_specs=(
              pl.BlockSpec((TM, Cout), lambda n, t: (n * n_dt + t, 0)),
              pl.BlockSpec((None, None, 2, Cout), lambda n, t: (n, t, 0, 0)),
          ),
      ),
      compiler_params=pltpu.CompilerParams(
          dimension_semantics=("parallel", "parallel")),
  )(xt, wf)

  # -------- global BN stats (Chan parallel merge, equal-size tiles) -------------------
  means = stats[..., 0, :].reshape(-1, Cout)               # (num_tiles, Cout)
  m2s = stats[..., 1, :].reshape(-1, Cout)
  gmean = jnp.mean(means, axis=0)
  gm2 = jnp.sum(m2s, axis=0) + TM * jnp.sum((means - gmean) ** 2, axis=0)
  var = gm2 * (1.0 / M)                                    # biased variance, as BN uses
  inv = lax.rsqrt(var + BN_EPS)
  scale = gamma * inv
  shift = beta - gmean * scale

  # -------- fused jnp epilogue: scale/shift + ReLU + layout (single read, XLA-fused) --
  y = jnp.maximum(conv_flat.astype(jnp.float32) * scale + shift, 0.0)
  out = y.reshape(N, D, H, W, Cout)
  return jnp.transpose(out, (0, 4, 1, 2, 3))               # back to NCDHW


def conv_block_reference(x_ncdhw, weight, bias, gamma, beta):
  """Pure-JAX f32 reference (matches PyTorch ConvBlock forward in training mode)."""
  conv = lax.conv_general_dilated(
      x_ncdhw, weight, window_strides=(1, 1, 1), padding="SAME",
      dimension_numbers=("NCDHW", "OIDHW", "NCDHW"),
      precision=lax.Precision.HIGHEST)
  conv = conv + bias.reshape(1, -1, 1, 1, 1)
  mean = jnp.mean(conv, axis=(0, 2, 3, 4), keepdims=True)
  var = jnp.mean((conv - mean) ** 2, axis=(0, 2, 3, 4), keepdims=True)
  xhat = (conv - mean) * lax.rsqrt(var + BN_EPS)
  y = xhat * gamma.reshape(1, -1, 1, 1, 1) + beta.reshape(1, -1, 1, 1, 1)
  return jnp.maximum(y, 0.0)


if __name__ == "__main__":
  N, Cin, Cout = 2, 4, 16
  D = H = W = 8
  K = 3

  key = jax.random.PRNGKey(0)
  kx, kw_key, kb_key = jax.random.split(key, 3)

  x = jax.random.normal(kx, (N, Cin, D, H, W), dtype=jnp.float32)

  # Deterministic parameter init (PyTorch-style uniform bounds).
  fan_in = Cin * K * K * K
  bound = 1.0 / (fan_in ** 0.5)
  weight = jax.random.uniform(kw_key, (Cout, Cin, K, K, K), jnp.float32, -bound, bound)
  bias = jax.random.uniform(kb_key, (Cout,), jnp.float32, -bound, bound)
  gamma = jnp.ones((Cout,), jnp.float32)   # BatchNorm3d default weight
  beta = jnp.zeros((Cout,), jnp.float32)   # BatchNorm3d default bias

  out = jax.jit(conv_block_pallas)(x, weight, bias, gamma, beta)
  out = jax.block_until_ready(out)

  ref = conv_block_reference(x, weight, bias, gamma, beta)
  assert out.shape == (N, Cout, D, H, W)
  # Tolerance accounts for bf16 MXU operands and bf16 conv storage vs the f32 reference.
  err = jnp.max(jnp.abs(out - ref))
  assert jnp.allclose(out, ref, atol=2e-2, rtol=2e-2), f"max abs err {err}"

  print("KERNEL_OK")
</pallas_src>

<mosaic_0001>
module attributes {stable_mosaic.version = 11 : i64} {
  func.func @conv_stats_kernel(%arg0: i32, %arg1: i32, %arg2: memref<1x1x10x64x36xbf16, #tpu.memory_space<vmem>>, %arg3: memref<3x36x16xbf16, #tpu.memory_space<vmem>>, %arg4: memref<512x16xbf16, #tpu.memory_space<vmem>>, %arg5: memref<1x1x2x16xf32, #tpu.memory_space<vmem>>) attributes {dimension_semantics = [#tpu.dimension_semantics<parallel>, #tpu.dimension_semantics<parallel>], iteration_bounds = array<i64: 2, 1>, scalar_prefetch = 0 : i64, scratch_operands = 0 : i64, tpu.core_type = #tpu.core_type<tc>, window_params = [{transform_indices = @transform_0, window_bounds = array<i64: 1, 1, 10, 64, 36>}, {pipeline_mode = #tpu.pipeline_mode<synchronous>, transform_indices = @transform_1, window_bounds = array<i64: 3, 36, 16>}, {transform_indices = @transform_2, window_bounds = array<i64: 512, 16>}, {transform_indices = @transform_3, window_bounds = array<i64: 1, 1, 2, 16>}]} {
    %cst = arith.constant 0.000000e+00 : f32
    %0 = vector.broadcast %cst : f32 to vector<512x16xf32>
    %c0 = arith.constant 0 : index
    %c0_0 = arith.constant 0 : index
    %c0_1 = arith.constant 0 : index
    %c0_2 = arith.constant 0 : index
    %c0_3 = arith.constant 0 : index
    %1 = vector.load %arg2[%c0, %c0_0, %c0_1, %c0_2, %c0_3] : memref<1x1x10x64x36xbf16, #tpu.memory_space<vmem>>, vector<1x1x8x64x36xbf16>
    %2 = vector.shape_cast %1 : vector<1x1x8x64x36xbf16> to vector<8x64x36xbf16>
    %3 = vector.shape_cast %2 : vector<8x64x36xbf16> to vector<512x36xbf16>
    %c0_4 = arith.constant 0 : index
    %c0_5 = arith.constant 0 : index
    %c0_6 = arith.constant 0 : index
    %4 = vector.load %arg3[%c0_4, %c0_5, %c0_6] : memref<3x36x16xbf16, #tpu.memory_space<vmem>>, vector<1x36x16xbf16>
    %5 = vector.shape_cast %4 : vector<1x36x16xbf16> to vector<36x16xbf16>
    %cst_7 = arith.constant dense<0.000000e+00> : vector<512x16xf32>
    %6 = tpu.matmul %3, %5, %cst_7 {dimension_numbers = #tpu.dot_dimension_numbers<[1], [0], [0], [1], [0, 0, 1, 1], [], []>} : vector<512x36xbf16>, vector<36x16xbf16>, vector<512x16xf32> -> vector<512x16xf32>
    %7 = arith.addf %0, %6 : vector<512x16xf32>
    %c0_8 = arith.constant 0 : index
    %c0_9 = arith.constant 0 : index
    %c1 = arith.constant 1 : index
    %c0_10 = arith.constant 0 : index
    %c0_11 = arith.constant 0 : index
    %8 = vector.load %arg2[%c0_8, %c0_9, %c1, %c0_10, %c0_11] : memref<1x1x10x64x36xbf16, #tpu.memory_space<vmem>>, vector<1x1x8x64x36xbf16>
    %9 = vector.shape_cast %8 : vector<1x1x8x64x36xbf16> to vector<8x64x36xbf16>
    %10 = vector.shape_cast %9 : vector<8x64x36xbf16> to vector<512x36xbf16>
    %c1_12 = arith.constant 1 : index
    %c0_13 = arith.constant 0 : index
    %c0_14 = arith.constant 0 : index
    %11 = vector.load %arg3[%c1_12, %c0_13, %c0_14] : memref<3x36x16xbf16, #tpu.memory_space<vmem>>, vector<1x36x16xbf16>
    %12 = vector.shape_cast %11 : vector<1x36x16xbf16> to vector<36x16xbf16>
    %cst_15 = arith.constant dense<0.000000e+00> : vector<512x16xf32>
    %13 = tpu.matmul %10, %12, %cst_15 {dimension_numbers = #tpu.dot_dimension_numbers<[1], [0], [0], [1], [0, 0, 1, 1], [], []>} : vector<512x36xbf16>, vector<36x16xbf16>, vector<512x16xf32> -> vector<512x16xf32>
    %14 = arith.addf %7, %13 : vector<512x16xf32>
    %c0_16 = arith.constant 0 : index
    %c0_17 = arith.constant 0 : index
    %c2 = arith.constant 2 : index
    %c0_18 = arith.constant 0 : index
    %c0_19 = arith.constant 0 : index
    %15 = vector.load %arg2[%c0_16, %c0_17, %c2, %c0_18, %c0_19] : memref<1x1x10x64x36xbf16, #tpu.memory_space<vmem>>, vector<1x1x8x64x36xbf16>
    %16 = vector.shape_cast %15 : vector<1x1x8x64x36xbf16> to vector<8x64x36xbf16>
    %17 = vector.shape_cast %16 : vector<8x64x36xbf16> to vector<512x36xbf16>
    %c2_20 = arith.constant 2 : index
    %c0_21 = arith.constant 0 : index
    %c0_22 = arith.constant 0 : index
    %18 = vector.load %arg3[%c2_20, %c0_21, %c0_22] : memref<3x36x16xbf16, #tpu.memory_space<vmem>>, vector<1x36x16xbf16>
    %19 = vector.shape_cast %18 : vector<1x36x16xbf16> to vector<36x16xbf16>
    %cst_23 = arith.constant dense<0.000000e+00> : vector<512x16xf32>
    %20 = tpu.matmul %17, %19, %cst_23 {dimension_numbers = #tpu.dot_dimension_numbers<[1], [0], [0], [1], [0, 0, 1, 1], [], []>} : vector<512x36xbf16>, vector<36x16xbf16>, vector<512x16xf32> -> vector<512x16xf32>
    %21 = arith.addf %14, %20 : vector<512x16xf32>
    %22 = arith.truncf %21 : vector<512x16xf32> to vector<512x16xbf16>
    %c0_24 = arith.constant 0 : index
    %c0_25 = arith.constant 0 : index
    %23 = vector.load %arg4[%c0_24, %c0_25] : memref<512x16xbf16, #tpu.memory_space<vmem>>, vector<512x16xbf16>
    tpu.vector_store %arg4[%c0_24, %c0_25], %22 {strides = array<i32>} : memref<512x16xbf16, #tpu.memory_space<vmem>>, vector<512x16xbf16>,
    %cst_26 = arith.constant dense<0.000000e+00> : vector<16xf32>
    %24 = vector.multi_reduction <add>, %21, %cst_26 [0] : vector<512x16xf32> to vector<16xf32>
    %25 = vector.shape_cast %24 : vector<16xf32> to vector<1x16xf32>
    %cst_27 = arith.constant 0.001953125 : f32
    %26 = vector.broadcast %cst_27 : f32 to vector<1x16xf32>
    %27 = arith.mulf %25, %26 : vector<1x16xf32>
    %28 = vector.broadcast %27 : vector<1x16xf32> to vector<512x16xf32>
    %29 = arith.subf %21, %28 : vector<512x16xf32>
    %30 = arith.mulf %29, %29 : vector<512x16xf32>
    %cst_28 = arith.constant dense<0.000000e+00> : vector<16xf32>
    %31 = vector.multi_reduction <add>, %30, %cst_28 [0] : vector<512x16xf32> to vector<16xf32>
    %32 = vector.shape_cast %31 : vector<16xf32> to vector<1x16xf32>
    %33 = tpu.concatenate %27, %32 in 0 : vector<1x16xf32>, vector<1x16xf32> -> vector<2x16xf32>
    %c0_29 = arith.constant 0 : index
    %c0_30 = arith.constant 0 : index
    %c0_31 = arith.constant 0 : index
    %c0_32 = arith.constant 0 : index
    %34 = vector.load %arg5[%c0_29, %c0_30, %c0_31, %c0_32] : memref<1x1x2x16xf32, #tpu.memory_space<vmem>>, vector<1x1x2x16xf32>
    %35 = vector.shape_cast %34 : vector<1x1x2x16xf32> to vector<2x16xf32>
    %36 = vector.shape_cast %33 : vector<2x16xf32> to vector<1x1x2x16xf32>
    tpu.vector_store %arg5[%c0_29, %c0_30, %c0_31, %c0_32], %36 {strides = array<i32>} : memref<1x1x2x16xf32, #tpu.memory_space<vmem>>, vector<1x1x2x16xf32>,
    return
  }
  func.func @transform_0(%arg0: i32, %arg1: i32) -> (i32, i32, i32, i32, i32) {
    %c0_i32 = arith.constant 0 : i32
    %c0_i32_0 = arith.constant 0 : i32
    %c0_i32_1 = arith.constant 0 : i32
    %c0_i32_2 = arith.constant 0 : i32
    return %arg0, %arg1, %c0_i32, %c0_i32_0, %c0_i32_1 : i32, i32, i32, i32, i32
  }
  func.func @transform_1(%arg0: i32, %arg1: i32) -> (i32, i32, i32) {
    %c0_i32 = arith.constant 0 : i32
    %c0_i32_0 = arith.constant 0 : i32
    %c0_i32_1 = arith.constant 0 : i32
    %c0_i32_2 = arith.constant 0 : i32
    return %c0_i32, %c0_i32_0, %c0_i32_1 : i32, i32, i32
  }
  func.func @transform_2(%arg0: i32, %arg1: i32) -> (i32, i32) {
    %c1_i32 = arith.constant 1 : i32
    %0 = arith.muli %arg0, %c1_i32 : i32
    %1 = arith.addi %0, %arg1 : i32
    %c0_i32 = arith.constant 0 : i32
    %c0_i32_0 = arith.constant 0 : i32
    return %1, %c0_i32 : i32, i32
  }
  func.func @transform_3(%arg0: i32, %arg1: i32) -> (i32, i32, i32, i32) {
    %c0_i32 = arith.constant 0 : i32
    %c0_i32_0 = arith.constant 0 : i32
    %c0_i32_1 = arith.constant 0 : i32
    return %arg0, %arg1, %c0_i32, %c0_i32_0 : i32, i32, i32, i32
  }
}

</mosaic_0001>

<llo_original>
// kernel: conv_block_pallas.1
$region0: #{conv_block_pallas.1}
  #allocation0 [shape = 'u32[]', space=smem, size = 0x4, offset = 0x4, fixed_abs, tag = 'smem constant byte address 0x4 - core index']
  #allocation1 [shape = 'u32[144,128]{1,0:T(1,128)}', space=vmem, size = 0x12000, scoped, tag = 'internal scratch']
  %s0 = inlined_call_operand.vmem [shape: bf16[2,1,10,64,36], index: 0, kind: input, shape index: {}]
  %s1 = inlined_call_operand.vmem [shape: bf16[3,36,16], index: 1, kind: input, shape index: {}]
  %s2 = inlined_call_operand.vmem [shape: bf16[1024,16], index: 2, kind: output, shape index: {0}]
  %s3 = inlined_call_operand.vmem [shape: f32[2,1,2,16], index: 3, kind: output, shape index: {1}]
  %4 = xla_tuple %s2, %s3
  %s5 = sld [smem:[#allocation0]]
  $region49: #{conv_block_pallas.1} parent=0
    _
  %s7 = ssub.s32 1, %s5
  %s8 = scalar_select 0, %s7, %s5
  loop: start=0, step=1, limit=4
  $region2: #{conv_block_pallas.1} parent=0 // loop_pre_header
    _
  $region3: #{conv_block_pallas.1} parent=0 // loop_header
    %s10 = sphi 0, %s14
    %p11 = scmp.ge.s32.totalorder %s10, 4
    %s17 = sphi 0, %s29
    %s18 = sphi 0, %s25
    %s19 = sphi 0, %s17
    %s20 = sphi 0, %s18
    %s21 = sphi 0, %s19
    %s22 = sphi 0, %s20
    %s34 = sphi 0, %s36
    %s37 = sphi 0, %s34
    %s38 = sphi 0, %s37
    %s54 = sphi 0, %s38
    %s58 = sphi 0, %s58
    %s60 = sphi 0, %s58
    %s61 = sphi 0, %s60
    %s75 = sphi 0, %s61
    %s83 = sphi 0, %s85
    %s86 = sphi 0, %s83
    %s87 = sphi 0, %s86
    %s103 = sphi 0, %s87
    %s111 = sphi 0, %s113
    %s114 = sphi 0, %s111
    %s115 = sphi 0, %s114
    %s131 = sphi 0, %s115
  $region4: #{conv_block_pallas.1} parent=0 // loop_header_branch
    %13 = sbr.rel (%p11) target = $region8
  $region5: #{conv_block_pallas.1} parent=0 // loop_body
    %s15 = ssub.s32 %s10, 1
    %s16 = ssub.s32 %s10, 2
    %s23 = sadd.s32 1, %s18
    %p24 = scmp.ge.s32.totalorder %s23, 1
    %s25 = scalar_select %p24, 0, %s23
    %s26 = sadd.s32 1, %s17
    %s27 = scalar_select %p24, %s26, %s17
    %p28 = scmp.ge.s32.totalorder %s27, 2
    %s29 = scalar_select %p28, 0, %s27
    %s30 = ssub.s32 %s17, %s29
    %s31 = ssub.s32 %s18, %s25
    %s32 = sor.u32 %s30, %s31
    %p33 = scmp.eq.s32.totalorder %s32, 0
    %s35 = sadd.s32 %s34, 1
    %s36 = scalar_select %p33, %s34, %s35
    %p39 = pneg %p33
    %p40 = scmp.eq.s32.totalorder %s10, 1
    %p41 = por %p39, %p40
    %p42 = scmp.ne.s32.totalorder %s34, %s37
    %p43 = scmp.eq.s32.totalorder %s10, 0
    %p44 = por %p42, %p43
    %p45 = scmp.ne.s32.totalorder %s34, %s37
    %p46 = scmp.eq.s32.totalorder %s15, 1
    %p47 = por %p45, %p46
    %p48 = scmp.ne.s32.totalorder %s37, %s38
    %p49 = scmp.eq.s32.totalorder %s15, 0
    %p50 = por %p48, %p49
    %p51 = scmp.ne.s32.totalorder %s37, %s38
    %p52 = scmp.eq.s32.totalorder %s16, 1
    %p53 = por %p51, %p52
    %p55 = scmp.ne.s32.totalorder %s38, %s54
    %p56 = scmp.eq.s32.totalorder %s16, 0
    %p57 = por %p55, %p56
    %s59 = sadd.s32 %s58, 1
    %p62 = scmp.eq.s32.totalorder %s10, 1
    %p63 = scmp.ne.s32.totalorder %s58, %s60
    %p64 = scmp.eq.s32.totalorder %s10, 0
    %p65 = por %p63, %p64
    %p66 = scmp.ne.s32.totalorder %s58, %s60
    %p67 = scmp.eq.s32.totalorder %s15, 1
    %p68 = por %p66, %p67
    %p69 = scmp.ne.s32.totalorder %s60, %s61
    %p70 = scmp.eq.s32.totalorder %s15, 0
    %p71 = por %p69, %p70
    %p72 = scmp.ne.s32.totalorder %s60, %s61
    %p73 = scmp.eq.s32.totalorder %s16, 1
    %p74 = por %p72, %p73
    %p76 = scmp.ne.s32.totalorder %s61, %s75
    %p77 = scmp.eq.s32.totalorder %s16, 0
    %p78 = por %p76, %p77
    %s79 = sadd.s32 %s17, %s18
    %s80 = sadd.s32 %s29, %s25
    %s81 = ssub.s32 %s79, %s80
    %p82 = scmp.eq.s32.totalorder %s81, 0
    %s84 = sadd.s32 %s83, 1
    %s85 = scalar_select %p82, %s83, %s84
    %p88 = pneg %p82
    %p89 = scmp.eq.s32.totalorder %s10, 1
    %p90 = por %p88, %p89
    %p91 = scmp.ne.s32.totalorder %s83, %s86
    %p92 = scmp.eq.s32.totalorder %s10, 0
    %p93 = por %p91, %p92
    %p94 = scmp.ne.s32.totalorder %s83, %s86
    %p95 = scmp.eq.s32.totalorder %s15, 1
    %p96 = por %p94, %p95
    %p97 = scmp.ne.s32.totalorder %s86, %s87
    %p98 = scmp.eq.s32.totalorder %s15, 0
    %p99 = por %p97, %p98
    %p100 = scmp.ne.s32.totalorder %s86, %s87
    %p101 = scmp.eq.s32.totalorder %s16, 1
    %p102 = por %p100, %p101
    %p104 = scmp.ne.s32.totalorder %s87, %s103
    %p105 = scmp.eq.s32.totalorder %s16, 0
    %p106 = por %p104, %p105
    %s107 = ssub.s32 %s17, %s29
    %s108 = ssub.s32 %s18, %s25
    %s109 = sor.u32 %s107, %s108
    %p110 = scmp.eq.s32.totalorder %s109, 0
    %s112 = sadd.s32 %s111, 1
    %s113 = scalar_select %p110, %s111, %s112
    %p116 = pneg %p110
    %p117 = scmp.eq.s32.totalorder %s10, 1
    %p118 = por %p116, %p117
    %p119 = scmp.ne.s32.totalorder %s111, %s114
    %p120 = scmp.eq.s32.totalorder %s10, 0
    %p121 = por %p119, %p120
    %p122 = scmp.ne.s32.totalorder %s111, %s114
    %p123 = scmp.eq.s32.totalorder %s15, 1
    %p124 = por %p122, %p123
    %p125 = scmp.ne.s32.totalorder %s114, %s115
    %p126 = scmp.eq.s32.totalorder %s15, 0
    %p127 = por %p125, %p126
    %p128 = scmp.ne.s32.totalorder %s114, %s115
    %p129 = scmp.eq.s32.totalorder %s16, 1
    %p130 = por %p128, %p129
    %p132 = scmp.ne.s32.totalorder %s115, %s131
    %p133 = scmp.eq.s32.totalorder %s16, 0
    %p134 = por %p132, %p133
    %p135 = scmp.le.s32.totalorder 1, %s10
    %p136 = scmp.lt.s32.totalorder %s10, 3
    %p137 = pnand %p135, %p136
    %p138 = pneg %p137
    // Predicated region
    $region9: #{conv_block_pallas.1} parent=5 // pred_check
      _
    $region10: #{conv_block_pallas.1} parent=5 // pred_check_branch
      %140 = sbr.rel (%p137) target = $region12
    $region11: #{conv_block_pallas.1} parent=5 // pred_region
      %s141 = ssub.s32 %s10, 1
      // Predicated region
      $region13: #{conv_block_pallas.1} parent=11 // pred_check
        %p142 = pneg %p71
      $region14: #{conv_block_pallas.1} parent=11 // pred_check_branch
        %144 = sbr.rel (%p142) target = $region16
      $region15: #{conv_block_pallas.1} parent=11 // pred_region
        _
      $region16: #{conv_block_pallas.1} parent=11 // pred_fallthru
        _
    $region12: #{conv_block_pallas.1} parent=5 // pred_fallthru
      _
    %p145 = scmp.lt.s32.totalorder %s10, 2
    // Predicated region
    $region17: #{conv_block_pallas.1} parent=5 // pred_check
      %p146 = pneg %p145
    $region18: #{conv_block_pallas.1} parent=5 // pred_check_branch
      %148 = sbr.rel (%p146) target = $region20
    $region19: #{conv_block_pallas.1} parent=5 // pred_region
      // Predicated region
      $region21: #{conv_block_pallas.1} parent=19 // pred_check
        %p149 = pneg %p44
      $region22: #{conv_block_pallas.1} parent=19 // pred_check_branch
        %151 = sbr.rel (%p149) target = $region24
      $region23: #{conv_block_pallas.1} parent=19 // pred_region
        %p152 = scmp.lt.s32.totalorder %s17, 1
        %s153 = scalar_select %p152, %s17, 1
        %p154 = scmp.lt.s32.totalorder %s18, 0
        %s155 = scalar_select %p154, %s18, 0
        %s156 = smul.addr %s155, 80
        %s157 = smul.addr %s153, 80
        %s158 = sadd.s32 %s156, %s157
        %s159 = smul.addr %s158, 4
        %s160 = scalar_lea.vmem %s0, %s159
      $region24: #{conv_block_pallas.1} parent=19 // pred_fallthru
        _
    $region20: #{conv_block_pallas.1} parent=5 // pred_fallthru
      _
    %p161 = scmp.le.s32.totalorder 1, %s10
    %p162 = scmp.lt.s32.totalorder %s10, 3
    %p163 = pnand %p161, %p162
    %p164 = pneg %p163
    // Predicated region
    $region25: #{conv_block_pallas.1} parent=5 // pred_check
      _
    $region26: #{conv_block_pallas.1} parent=5 // pred_check_branch
      %166 = sbr.rel (%p163) target = $region28
    $region27: #{conv_block_pallas.1} parent=5 // pred_region
      %s167 = ssub.s32 %s10, 1
      %p168 = scmp.lt.s32.totalorder %s19, 1
      %s169 = scalar_select %p168, %s19, 1
      %p170 = scmp.lt.s32.totalorder %s20, 0
      %s171 = scalar_select %p170, %s20, 0
      %s172 = smul.addr %s171, 80
      %s173 = smul.addr %s169, 80
      %s174 = sadd.s32 %s172, %s173
      %s175 = smul.addr %s174, 4
      %s176 = scalar_lea.vmem %s0, %s175
      %p177 = pneg %p50
      %p178 = pneg %p47
      %p179 = pneg %p71
      %p180 = pneg %p68
      %p181 = pneg %p99
      %p182 = pneg %p96
      %s183 = sadd.s32 %s19, %s20
      %s184 = smul.u32 64, %s183
      %p185 = scmp.lt.s32.totalorder %s184, 127
      %s186 = scalar_select %p185, %s184, 127
      %s187 = smul.addr %s186, 4
      %s188 = scalar_lea.vmem %s2, %s187
      %p189 = pneg %p127
      %p190 = pneg %p124
      %p191 = scmp.lt.s32.totalorder %s19, 1
      %s192 = scalar_select %p191, %s19, 1
      %p193 = scmp.lt.s32.totalorder %s20, 0
      %s194 = scalar_select %p193, %s20, 0
      %s195 = sadd.s32 %s194, %s192
      %s196 = smul.addr %s195, 2
      %s197 = scalar_lea.vmem %s3, %s196
      %p198 = scmp.lt.s32.totalorder %s19, 1
      %s199 = scalar_select %p198, %s19, 1
      %p200 = scmp.lt.s32.totalorder %s20, 0
      %s201 = scalar_select %p200, %s20, 0
      %s202 = smul.addr %s201, 80
      %s203 = smul.addr %s199, 80
      %s204 = sadd.s32 %s202, %s203
      %s205 = smul.addr %s204, 4
      %s206 = scalar_lea.vmem %s0, %s205
      %s207 = sadd.s32 %s19, %s20
      %s208 = smul.u32 64, %s207
      %p209 = scmp.lt.s32.totalorder %s208, 127
      %s210 = scalar_select %p209, %s208, 127
      %s211 = smul.addr %s210, 4
      %s212 = scalar_lea.vmem %s2, %s211
      %s213 = sadd.s32 %s19, %s20
      %s214 = smul.u32 64, %s213
      %p215 = scmp.lt.s32.totalorder %s19, 1
      %s216 = scalar_select %p215, %s19, 1
      %p217 = scmp.lt.s32.totalorder %s20, 0
      %s218 = scalar_select %p217, %s20, 0
      %s219 = sadd.s32 %s218, %s216
      %s220 = smul.addr %s219, 2
      %s221 = scalar_lea.vmem %s3, %s220
      %v223 = vld [vmem:[%s206] sm:$0xf]
      %v224 = vld [vmem:[%s206 + $0x4] sm:$0xf]
      %v225 = vld [vmem:[%s206 + $0x8] sm:$0xf]
      %v226 = vld [vmem:[%s206 + $0xc] sm:$0xf]
      %v227 = vld [vmem:[%s206 + $0x10] sm:$0xf]
      %v228 = vld [vmem:[%s206 + $0x14] sm:$0xf]
      %v229 = vld [vmem:[%s206 + $0x18] sm:$0xf]
      %v230 = vld [vmem:[%s206 + $0x1c] sm:$0xf]
      %v231 = vld [vmem:[%s206 + $0x20] sm:$0xf]
      %v232 = vld [vmem:[%s206 + $0x24] sm:$0xf]
      %v233 = vld [vmem:[%s206 + $0x28] sm:$0xf]
      %v234 = vld [vmem:[%s206 + $0x2c] sm:$0xf]
      %v235 = vld [vmem:[%s206 + $0x30] sm:$0xf]
      %v236 = vld [vmem:[%s206 + $0x34] sm:$0xf]
      %v237 = vld [vmem:[%s206 + $0x38] sm:$0xf]
      %v238 = vld [vmem:[%s206 + $0x3c] sm:$0xf]
      %v239 = vld [vmem:[%s206 + $0x40] sm:$0xf]
      %v240 = vld [vmem:[%s206 + $0x44] sm:$0xf]
      %v241 = vld [vmem:[%s206 + $0x48] sm:$0xf]
      %v242 = vld [vmem:[%s206 + $0x4c] sm:$0xf]
      %v243 = vld [vmem:[%s206 + $0x50] sm:$0xf]
      %v244 = vld [vmem:[%s206 + $0x54] sm:$0xf]
      %v245 = vld [vmem:[%s206 + $0x58] sm:$0xf]
      %v246 = vld [vmem:[%s206 + $0x5c] sm:$0xf]
      %v247 = vld [vmem:[%s206 + $0x60] sm:$0xf]
      %v248 = vld [vmem:[%s206 + $0x64] sm:$0xf]
      %v249 = vld [vmem:[%s206 + $0x68] sm:$0xf]
      %v250 = vld [vmem:[%s206 + $0x6c] sm:$0xf]
      %v251 = vld [vmem:[%s206 + $0x70] sm:$0xf]
      %v252 = vld [vmem:[%s206 + $0x74] sm:$0xf]
      %v253 = vld [vmem:[%s206 + $0x78] sm:$0xf]
      %v254 = vld [vmem:[%s206 + $0x7c] sm:$0xf]
      %v255 = vld [vmem:[%s206 + $0x80] sm:$0xf]
      %v256 = vld [vmem:[%s206 + $0x84] sm:$0xf]
      %v257 = vld [vmem:[%s206 + $0x88] sm:$0xf]
      %v258 = vld [vmem:[%s206 + $0x8c] sm:$0xf]
      %v259 = vld [vmem:[%s206 + $0x90] sm:$0xf]
      %v260 = vld [vmem:[%s206 + $0x94] sm:$0xf]
      %v261 = vld [vmem:[%s206 + $0x98] sm:$0xf]
      %v262 = vld [vmem:[%s206 + $0x9c] sm:$0xf]
      %v263 = vld [vmem:[%s206 + $0xa0] sm:$0xf]
      %v264 = vld [vmem:[%s206 + $0xa4] sm:$0xf]
      %v265 = vld [vmem:[%s206 + $0xa8] sm:$0xf]
      %v266 = vld [vmem:[%s206 + $0xac] sm:$0xf]
      %v267 = vld [vmem:[%s206 + $0xb0] sm:$0xf]
      %v268 = vld [vmem:[%s206 + $0xb4] sm:$0xf]
      %v269 = vld [vmem:[%s206 + $0xb8] sm:$0xf]
      %v270 = vld [vmem:[%s206 + $0xbc] sm:$0xf]
      %v271 = vld [vmem:[%s206 + $0xc0] sm:$0xf]
      %v272 = vld [vmem:[%s206 + $0xc4] sm:$0xf]
      %v273 = vld [vmem:[%s206 + $0xc8] sm:$0xf]
      %v274 = vld [vmem:[%s206 + $0xcc] sm:$0xf]
      %v275 = vld [vmem:[%s206 + $0xd0] sm:$0xf]
      %v276 = vld [vmem:[%s206 + $0xd4] sm:$0xf]
      %v277 = vld [vmem:[%s206 + $0xd8] sm:$0xf]
      %v278 = vld [vmem:[%s206 + $0xdc] sm:$0xf]
      %v279 = vld [vmem:[%s206 + $0xe0] sm:$0xf]
      %v280 = vld [vmem:[%s206 + $0xe4] sm:$0xf]
      %v281 = vld [vmem:[%s206 + $0xe8] sm:$0xf]
      %v282 = vld [vmem:[%s206 + $0xec] sm:$0xf]
      %v283 = vld [vmem:[%s206 + $0xf0] sm:$0xf]
      %v284 = vld [vmem:[%s206 + $0xf4] sm:$0xf]
      %v285 = vld [vmem:[%s206 + $0xf8] sm:$0xf]
      %v286 = vld [vmem:[%s206 + $0xfc] sm:$0xf]
      %v287 = vld [vmem:[%s1] sm:$0xf]
      %v288 = vld [vmem:[%s1 + $0x4] sm:$0xf]
      %v289 = vld [vmem:[%s1 + $0x8] sm:$0xf]
      %v290 = vld [vmem:[%s1 + $0xc] sm:$0xf]
      %v291 = vld [vmem:[%s1 + $0x10] sm:$0x3]
      %s292 = scalar_lea.vmem %s206, 32
      %v293 = vld [vmem:[%s292] sm:$0xf]
      %v294 = vld [vmem:[%s292 + $0x4] sm:$0xf]
      %v295 = vld [vmem:[%s292 + $0x8] sm:$0xf]
      %v296 = vld [vmem:[%s292 + $0xc] sm:$0xf]
      %v297 = vld [vmem:[%s292 + $0x10] sm:$0xf]
      %v298 = vld [vmem:[%s292 + $0x14] sm:$0xf]
      %v299 = vld [vmem:[%s292 + $0x18] sm:$0xf]
      %v300 = vld [vmem:[%s292 + $0x1c] sm:$0xf]
      %v301 = vld [vmem:[%s292 + $0x20] sm:$0xf]
      %v302 = vld [vmem:[%s292 + $0x24] sm:$0xf]
      %v303 = vld [vmem:[%s292 + $0x28] sm:$0xf]
      %v304 = vld [vmem:[%s292 + $0x2c] sm:$0xf]
      %v305 = vld [vmem:[%s292 + $0x30] sm:$0xf]
      %v306 = vld [vmem:[%s292 + $0x34] sm:$0xf]
      %v307 = vld [vmem:[%s292 + $0x38] sm:$0xf]
      %v308 = vld [vmem:[%s292 + $0x3c] sm:$0xf]
      %v309 = vld [vmem:[%s292 + $0x40] sm:$0xf]
      %v310 = vld [vmem:[%s292 + $0x44] sm:$0xf]
      %v311 = vld [vmem:[%s292 + $0x48] sm:$0xf]
      %v312 = vld [vmem:[%s292 + $0x4c] sm:$0xf]
      %v313 = vld [vmem:[%s292 + $0x50] sm:$0xf]
      %v314 = vld [vmem:[%s292 + $0x54] sm:$0xf]
      %v315 = vld [vmem:[%s292 + $0x58] sm:$0xf]
      %v316 = vld [vmem:[%s292 + $0x5c] sm:$0xf]
      %v317 = vld [vmem:[%s292 + $0x60] sm:$0xf]
      %v318 = vld [vmem:[%s292 + $0x64] sm:$0xf]
      %v319 = vld [vmem:[%s292 + $0x68] sm:$0xf]
      %v320 = vld [vmem:[%s292 + $0x6c] sm:$0xf]
      %v321 = vld [vmem:[%s292 + $0x70] sm:$0xf]
      %v322 = vld [vmem:[%s292 + $0x74] sm:$0xf]
      %v323 = vld [vmem:[%s292 + $0x78] sm:$0xf]
      %v324 = vld [vmem:[%s292 + $0x7c] sm:$0xf]
      %v325 = vld [vmem:[%s292 + $0x80] sm:$0xf]
      %v326 = vld [vmem:[%s292 + $0x84] sm:$0xf]
      %v327 = vld [vmem:[%s292 + $0x88] sm:$0xf]
      %v328 = vld [vmem:[%s292 + $0x8c] sm:$0xf]
      %v329 = vld [vmem:[%s292 + $0x90] sm:$0xf]
      %v330 = vld [vmem:[%s292 + $0x94] sm:$0xf]
      %v331 = vld [vmem:[%s292 + $0x98] sm:$0xf]
      %v332 = vld [vmem:[%s292 + $0x9c] sm:$0xf]
      %v333 = vld [vmem:[%s292 + $0xa0] sm:$0xf]
      %v334 = vld [vmem:[%s292 + $0xa4] sm:$0xf]
      %v335 = vld [vmem:[%s292 + $0xa8] sm:$0xf]
      %v336 = vld [vmem:[%s292 + $0xac] sm:$0xf]
      %v337 = vld [vmem:[%s292 + $0xb0] sm:$0xf]
      %v338 = vld [vmem:[%s292 + $0xb4] sm:$0xf]
      %v339 = vld [vmem:[%s292 + $0xb8] sm:$0xf]
      %v340 = vld [vmem:[%s292 + $0xbc] sm:$0xf]
      %v341 = vld [vmem:[%s292 + $0xc0] sm:$0xf]
      %v342 = vld [vmem:[%s292 + $0xc4] sm:$0xf]
      %v343 = vld [vmem:[%s292 + $0xc8] sm:$0xf]
      %v344 = vld [vmem:[%s292 + $0xcc] sm:$0xf]
      %v345 = vld [vmem:[%s292 + $0xd0] sm:$0xf]
      %v346 = vld [vmem:[%s292 + $0xd4] sm:$0xf]
      %v347 = vld [vmem:[%s292 + $0xd8] sm:$0xf]
      %v348 = vld [vmem:[%s292 + $0xdc] sm:$0xf]
      %v349 = vld [vmem:[%s292 + $0xe0] sm:$0xf]
      %v350 = vld [vmem:[%s292 + $0xe4] sm:$0xf]
      %v351 = vld [vmem:[%s292 + $0xe8] sm:$0xf]
      %v352 = vld [vmem:[%s292 + $0xec] sm:$0xf]
      %v353 = vld [vmem:[%s292 + $0xf0] sm:$0xf]
      %v354 = vld [vmem:[%s292 + $0xf4] sm:$0xf]
      %v355 = vld [vmem:[%s292 + $0xf8] sm:$0xf]
      %v356 = vld [vmem:[%s292 + $0xfc] sm:$0xf]
      %s357 = scalar_lea.vmem %s1, 20
      %v358 = vld [vmem:[%s357] sm:$0xf]
      %v359 = vld [vmem:[%s357 + $0x4] sm:$0xf]
      %v360 = vld [vmem:[%s357 + $0x8] sm:$0xf]
      %v361 = vld [vmem:[%s357 + $0xc] sm:$0xf]
      %v362 = vld [vmem:[%s357 + $0x10] sm:$0x3]
      %v427 = vunpack.c.l.b16 %v293
      %v428 = vunpack.c.l.b16 %v294
      %v429 = vunpack.c.l.b16 %v295
      %v430 = vunpack.c.l.b16 %v296
      %v431 = vunpack.c.l.b16 %v297
      %v432 = vunpack.c.l.b16 %v298
      %v433 = vunpack.c.l.b16 %v299
      %v434 = vunpack.c.l.b16 %v300
      %v435 = vunpack.c.l.b16 %v301
      %v436 = vunpack.c.l.b16 %v302
      %v437 = vunpack.c.l.b16 %v303
      %v438 = vunpack.c.l.b16 %v304
      %v439 = vunpack.c.l.b16 %v305
      %v440 = vunpack.c.l.b16 %v306
      %v441 = vunpack.c.l.b16 %v307
      %v442 = vunpack.c.l.b16 %v308
      %v443 = vunpack.c.l.b16 %v309
      %v444 = vunpack.c.l.b16 %v310
      %v445 = vunpack.c.l.b16 %v311
      %v446 = vunpack.c.l.b16 %v312
      %v447 = vunpack.c.l.b16 %v313
      %v448 = vunpack.c.l.b16 %v314
      %v449 = vunpack.c.l.b16 %v315
      %v450 = vunpack.c.l.b16 %v316
      %v451 = vunpack.c.l.b16 %v317
      %v452 = vunpack.c.l.b16 %v318
      %v453 = vunpack.c.l.b16 %v319
      %v454 = vunpack.c.l.b16 %v320
      %v455 = vunpack.c.l.b16 %v321
      %v456 = vunpack.c.l.b16 %v322
      %v457 = vunpack.c.l.b16 %v323
      %v458 = vunpack.c.l.b16 %v324
      %v459 = vunpack.c.l.b16 %v325
      %v460 = vunpack.c.l.b16 %v326
      %v461 = vunpack.c.l.b16 %v327
      %v462 = vunpack.c.l.b16 %v328
      %v463 = vunpack.c.l.b16 %v329
      %v464 = vunpack.c.l.b16 %v330
      %v465 = vunpack.c.l.b16 %v331
      %v466 = vunpack.c.l.b16 %v332
      %v467 = vunpack.c.l.b16 %v333
      %v468 = vunpack.c.l.b16 %v334
      %v469 = vunpack.c.l.b16 %v335
      %v470 = vunpack.c.l.b16 %v336
      %v471 = vunpack.c.l.b16 %v337
      %v472 = vunpack.c.l.b16 %v338
      %v473 = vunpack.c.l.b16 %v339
      %v474 = vunpack.c.l.b16 %v340
      %v475 = vunpack.c.l.b16 %v341
      %v476 = vunpack.c.l.b16 %v342
      %v477 = vunpack.c.l.b16 %v343
      %v478 = vunpack.c.l.b16 %v344
      %v479 = vunpack.c.l.b16 %v345
      %v480 = vunpack.c.l.b16 %v346
      %v481 = vunpack.c.l.b16 %v347
      %v482 = vunpack.c.l.b16 %v348
      %v483 = vunpack.c.l.b16 %v349
      %v484 = vunpack.c.l.b16 %v350
      %v485 = vunpack.c.l.b16 %v351
      %v486 = vunpack.c.l.b16 %v352
      %v487 = vunpack.c.l.b16 %v353
      %v488 = vunpack.c.l.b16 %v354
      %v489 = vunpack.c.l.b16 %v355
      %v490 = vunpack.c.l.b16 %v356
      %v491 = vpack.c.b16 %v428, %v427
      %v492 = vpack.c.b16 %v430, %v429
      %v493 = vpack.c.b16 %v432, %v431
      %v494 = vpack.c.b16 %v434, %v433
      %v495 = vpack.c.b16 %v436, %v435
      %v496 = vpack.c.b16 %v438, %v437
      %v497 = vpack.c.b16 %v440, %v439
      %v498 = vpack.c.b16 %v442, %v441
      %v499 = vpack.c.b16 %v444, %v443
      %v500 = vpack.c.b16 %v446, %v445
      %v501 = vpack.c.b16 %v448, %v447
      %v502 = vpack.c.b16 %v450, %v449
      %v503 = vpack.c.b16 %v452, %v451
      %v504 = vpack.c.b16 %v454, %v453
      %v505 = vpack.c.b16 %v456, %v455
      %v506 = vpack.c.b16 %v458, %v457
      %v507 = vpack.c.b16 %v460, %v459
      %v508 = vpack.c.b16 %v462, %v461
      %v509 = vpack.c.b16 %v464, %v463
      %v510 = vpack.c.b16 %v466, %v465
      %v511 = vpack.c.b16 %v468, %v467
      %v512 = vpack.c.b16 %v470, %v469
      %v513 = vpack.c.b16 %v472, %v471
      %v514 = vpack.c.b16 %v474, %v473
      %v515 = vpack.c.b16 %v476, %v475
      %v516 = vpack.c.b16 %v478, %v477
      %v517 = vpack.c.b16 %v480, %v479
      %v518 = vpack.c.b16 %v482, %v481
      %v519 = vpack.c.b16 %v484, %v483
      %v520 = vpack.c.b16 %v486, %v485
      %v521 = vpack.c.b16 %v488, %v487
      %v522 = vpack.c.b16 %v490, %v489
      %v528 = vunpack.c.l.b16 %v358
      %v529 = vunpack.c.l.b16 %v359
      %v530 = vunpack.c.l.b16 %v360
      %v531 = vunpack.c.l.b16 %v361
      %v532 = vunpack.c.l.b16 %v362
      %v533 = vpack.c.b16 %v529, %v528
      %v534 = vpack.c.b16 %v531, %v530
      %v535 = vpack.c.b16 %v532, %v532
      %vm538 = vcmask 293888
      %v540 = vsel %vm538, %v491, 0
      %v543 = vsel %vm538, %v492, 0
      %v546 = vsel %vm538, %v493, 0
      %v549 = vsel %vm538, %v494, 0
      %v552 = vsel %vm538, %v495, 0
      %v555 = vsel %vm538, %v496, 0
      %v558 = vsel %vm538, %v497, 0
      %v561 = vsel %vm538, %v498, 0
      %v564 = vsel %vm538, %v499, 0
      %v567 = vsel %vm538, %v500, 0
      %v570 = vsel %vm538, %v501, 0
      %v573 = vsel %vm538, %v502, 0
      %v576 = vsel %vm538, %v503, 0
      %v579 = vsel %vm538, %v504, 0
      %v582 = vsel %vm538, %v505, 0
      %v585 = vsel %vm538, %v506, 0
      %v588 = vsel %vm538, %v507, 0
      %v591 = vsel %vm538, %v508, 0
      %v594 = vsel %vm538, %v509, 0
      %v597 = vsel %vm538, %v510, 0
      %v600 = vsel %vm538, %v511, 0
      %v603 = vsel %vm538, %v512, 0
      %v606 = vsel %vm538, %v513, 0
      %v609 = vsel %vm538, %v514, 0
      %v612 = vsel %vm538, %v515, 0
      %v615 = vsel %vm538, %v516, 0
      %v618 = vsel %vm538, %v517, 0
      %v621 = vsel %vm538, %v518, 0
      %v624 = vsel %vm538, %v519, 0
      %v627 = vsel %vm538, %v520, 0
      %v630 = vsel %vm538, %v521, 0
      %v633 = vsel %vm538, %v522, 0
      %vm635 = vcmask 1041408
      %v637 = vsel %vm635, %v535, 0
      %639 = vmatprep.subr.bf16.mxu0 0
      %640 = vmatpush1.bf16.msra.mxu0 %v533
      %641 = vmatprep.subr.bf16.mxu0 0
      %642 = vmatpush1.bf16.msra.mxu0 %v534
      %643 = vmatprep.subr.bf16.mxu0 0
      %644 = vmatpush1.bf16.msra.mxu0 %v637
      %645 = vmatprep.subr.bf16.mxu0 0
      %646 = vmatpush1.bf16.msra.mxu0 0
      %647 = vmatprep.subr.bf16.mxu0 0
      %648 = vmatpush1.bf16.msra.mxu0 0
      %649 = vmatprep.subr.bf16.mxu0 0
      %650 = vmatpush1.bf16.msra.mxu0 0
      %651 = vmatprep.subr.bf16.mxu0 0
      %652 = vmatpush1.bf16.msra.mxu0 0
      %653 = vmatprep.subr.bf16.mxu0 0
      %654 = vmatpush1.bf16.msra.mxu0 0
      %655 = vmatprep.subr.bf16.mxu0 0
      %656 = vmatpush1.bf16.msra.mxu0 0
      %657 = vmatprep.subr.bf16.mxu0 0
      %658 = vmatpush1.bf16.msra.mxu0 0
      %659 = vmatprep.subr.bf16.mxu0 0
      %660 = vmatpush1.bf16.msra.mxu0 0
      %661 = vmatprep.subr.bf16.mxu0 0
      %662 = vmatpush1.bf16.msra.mxu0 0
      %663 = vmatprep.subr.bf16.mxu0 0
      %664 = vmatpush1.bf16.msra.mxu0 0
      %665 = vmatprep.subr.bf16.mxu0 0
      %666 = vmatpush1.bf16.msra.mxu0 0
      %667 = vmatprep.subr.bf16.mxu0 0
      %668 = vmatpush1.bf16.msra.mxu0 0
      %669 = vmatprep.subr.bf16.mxu0 0
      %670 = vmatpush1.bf16.msra.mxu0 0
      %671 = vmatprep.mubr.bf16.mxu0 0
      %672 = vmatmul.mubr.bf16.gmra.mrb[0].mxu0 %v540
      %v673 = vpop.f32.mrb[0].mxu0
      %v674 = vadd.f32 0.0, %v673
      %v675 = vpop.f32.mrb[0].mxu0
      %v676 = vpop.f32.mrb[0].mxu0
      %v677 = vadd.f32 0.0, %v676
      %v678 = vpop.f32.mrb[0].mxu0
      %679 = vmatprep.mubr.bf16.mxu0 0
      %680 = vmatmul.mubr.bf16.gmra.mrb[0].mxu0 %v543
      %v681 = vpop.f32.mrb[0].mxu0
      %v682 = vadd.f32 0.0, %v681
      %v683 = vpop.f32.mrb[0].mxu0
      %v684 = vpop.f32.mrb[0].mxu0
      %v685 = vadd.f32 0.0, %v684
      %v686 = vpop.f32.mrb[0].mxu0
      %687 = vmatprep.mubr.bf16.mxu0 0
      %688 = vmatmul.mubr.bf16.gmra.mrb[0].mxu0 %v546
      %v689 = vpop.f32.mrb[0].mxu0
      %v690 = vadd.f32 0.0, %v689
      %v691 = vpop.f32.mrb[0].mxu0
      %v692 = vpop.f32.mrb[0].mxu0
      %v693 = vadd.f32 0.0, %v692
      %v694 = vpop.f32.mrb[0].mxu0
      %695 = vmatprep.mubr.bf16.mxu0 0
      %696 = vmatmul.mubr.bf16.gmra.mrb[0].mxu0 %v549
      %v697 = vpop.f32.mrb[0].mxu0
      %v698 = vadd.f32 0.0, %v697
      %v699 = vpop.f32.mrb[0].mxu0
      %v700 = vpop.f32.mrb[0].mxu0
      %v701 = vadd.f32 0.0, %v700
      %v702 = vpop.f32.mrb[0].mxu0
      %703 = vmatprep.mubr.bf16.mxu0 0
      %704 = vmatmul.mubr.bf16.gmra.mrb[0].mxu0 %v552
      %v705 = vpop.f32.mrb[0].mxu0
      %v706 = vadd.f32 0.0, %v705
      %v707 = vpop.f32.mrb[0].mxu0
      %v708 = vpop.f32.mrb[0].mxu0
      %v709 = vadd.f32 0.0, %v708
      %v710 = vpop.f32.mrb[0].mxu0
      %711 = vmatprep.mubr.bf16.mxu0 0
      %712 = vmatmul.mubr.bf16.gmra.mrb[0].mxu0 %v555
      %v713 = vpop.f32.mrb[0].mxu0
      %v714 = vadd.f32 0.0, %v713
      %v715 = vpop.f32.mrb[0].mxu0
      %v716 = vpop.f32.mrb[0].mxu0
      %v717 = vadd.f32 0.0, %v716
      %v718 = vpop.f32.mrb[0].mxu0
      %719 = vmatprep.mubr.bf16.mxu0 0
      %720 = vmatmul.mubr.bf16.gmra.mrb[0].mxu0 %v558
      %v721 = vpop.f32.mrb[0].mxu0
      %v722 = vadd.f32 0.0, %v721
      %v723 = vpop.f32.mrb[0].mxu0
      %v724 = vpop.f32.mrb[0].mxu0
      %v725 = vadd.f32 0.0, %v724
      %v726 = vpop.f32.mrb[0].mxu0
      %727 = vmatprep.mubr.bf16.mxu0 0
      %728 = vmatmul.mubr.bf16.gmra.mrb[0].mxu0 %v561
      %v729 = vpop.f32.mrb[0].mxu0
      %v730 = vadd.f32 0.0, %v729
      %v731 = vpop.f32.mrb[0].mxu0
      %v732 = vpop.f32.mrb[0].mxu0
      %v733 = vadd.f32 0.0, %v732
      %v734 = vpop.f32.mrb[0].mxu0
      %735 = vmatprep.mubr.bf16.mxu0 0
      %736 = vmatmul.mubr.bf16.gmra.mrb[0].mxu0 %v564
      %v737 = vpop.f32.mrb[0].mxu0
      %v738 = vadd.f32 0.0, %v737
      %v739 = vpop.f32.mrb[0].mxu0
      %v740 = vpop.f32.mrb[0].mxu0
      %v741 = vadd.f32 0.0, %v740
      %v742 = vpop.f32.mrb[0].mxu0
      %743 = vmatprep.mubr.bf16.mxu0 0
      %744 = vmatmul.mubr.bf16.gmra.mrb[0].mxu0 %v567
      %v745 = vpop.f32.mrb[0].mxu0
      %v746 = vadd.f32 0.0, %v745
      %v747 = vpop.f32.mrb[0].mxu0
      %v748 = vpop.f32.mrb[0].mxu0
      %v749 = vadd.f32 0.0, %v748
      %v750 = vpop.f32.mrb[0].mxu0
      %751 = vmatprep.mubr.bf16.mxu0 0
      %752 = vmatmul.mubr.bf16.gmra.mrb[0].mxu0 %v570
      %v753 = vpop.f32.mrb[0].mxu0
      %v754 = vadd.f32 0.0, %v753
      %v755 = vpop.f32.mrb[0].mxu0
      %v756 = vpop.f32.mrb[0].mxu0
      %v757 = vadd.f32 0.0, %v756
      %v758 = vpop.f32.mrb[0].mxu0
      %759 = vmatprep.mubr.bf16.mxu0 0
      %760 = vmatmul.mubr.bf16.gmra.mrb[0].mxu0 %v573
      %v761 = vpop.f32.mrb[0].mxu0
      %v762 = vadd.f32 0.0, %v761
      %v763 = vpop.f32.mrb[0].mxu0
      %v764 = vpop.f32.mrb[0].mxu0
      %v765 = vadd.f32 0.0, %v764
      %v766 = vpop.f32.mrb[0].mxu0
      %767 = vmatprep.mubr.bf16.mxu0 0
      %768 = vmatmul.mubr.bf16.gmra.mrb[0].mxu0 %v576
      %v769 = vpop.f32.mrb[0].mxu0
      %v770 = vadd.f32 0.0, %v769
      %v771 = vpop.f32.mrb[0].mxu0
      %v772 = vpop.f32.mrb[0].mxu0
      %v773 = vadd.f32 0.0, %v772
      %v774 = vpop.f32.mrb[0].mxu0
      %775 = vmatprep.mubr.bf16.mxu0 0
      %776 = vmatmul.mubr.bf16.gmra.mrb[0].mxu0 %v579
      %v777 = vpop.f32.mrb[0].mxu0
      %v778 = vadd.f32 0.0, %v777
      %v779 = vpop.f32.mrb[0].mxu0
      %v780 = vpop.f32.mrb[0].mxu0
      %v781 = vadd.f32 0.0, %v780
      %v782 = vpop.f32.mrb[0].mxu0
      %783 = vmatprep.mubr.bf16.mxu0 0
      %784 = vmatmul.mubr.bf16.gmra.mrb[0].mxu0 %v582
      %v785 = vpop.f32.mrb[0].mxu0
      %v786 = vadd.f32 0.0, %v785
      %v787 = vpop.f32.mrb[0].mxu0
      %v788 = vpop.f32.mrb[0].mxu0
      %v789 = vadd.f32 0.0, %v788
      %v790 = vpop.f32.mrb[0].mxu0
      %791 = vmatprep.mubr.bf16.mxu0 0
      %792 = vmatmul.mubr.bf16.gmra.mrb[0].mxu0 %v585
      %v793 = vpop.f32.mrb[0].mxu0
      %v794 = vadd.f32 0.0, %v793
      %v795 = vpop.f32.mrb[0].mxu0
      %v796 = vpop.f32.mrb[0].mxu0
      %v797 = vadd.f32 0.0, %v796
      %v798 = vpop.f32.mrb[0].mxu0
      %799 = vmatprep.mubr.bf16.mxu0 0
      %800 = vmatmul.mubr.bf16.gmra.mrb[0].mxu0 %v588
      %v801 = vpop.f32.mrb[0].mxu0
      %v802 = vadd.f32 0.0, %v801
      %v803 = vpop.f32.mrb[0].mxu0
      %v804 = vpop.f32.mrb[0].mxu0
      %v805 = vadd.f32 0.0, %v804
      %v806 = vpop.f32.mrb[0].mxu0
      %807 = vmatprep.mubr.bf16.mxu0 0
      %808 = vmatmul.mubr.bf16.gmra.mrb[0].mxu0 %v591
      %v809 = vpop.f32.mrb[0].mxu0
      %v810 = vadd.f32 0.0, %v809
      %v811 = vpop.f32.mrb[0].mxu0
      %v812 = vpop.f32.mrb[0].mxu0
      %v813 = vadd.f32 0.0, %v812
      %v814 = vpop.f32.mrb[0].mxu0
      %815 = vmatprep.mubr.bf16.mxu0 0
      %816 = vmatmul.mubr.bf16.gmra.mrb[0].mxu0 %v594
      %v817 = vpop.f32.mrb[0].mxu0
      %v818 = vadd.f32 0.0, %v817
      %v819 = vpop.f32.mrb[0].mxu0
      %v820 = vpop.f32.mrb[0].mxu0
      %v821 = vadd.f32 0.0, %v820
      %v822 = vpop.f32.mrb[0].mxu0
      %823 = vmatprep.mubr.bf16.mxu0 0
      %824 = vmatmul.mubr.bf16.gmra.mrb[0].mxu0 %v597
      %v825 = vpop.f32.mrb[0].mxu0
      %v826 = vadd.f32 0.0, %v825
      %v827 = vpop.f32.mrb[0].mxu0
      %v828 = vpop.f32.mrb[0].mxu0
      %v829 = vadd.f32 0.0, %v828
      %v830 = vpop.f32.mrb[0].mxu0
      %831 = vmatprep.mubr.bf16.mxu0 0
      %832 = vmatmul.mubr.bf16.gmra.mrb[0].mxu0 %v600
      %v833 = vpop.f32.mrb[0].mxu0
      %v834 = vadd.f32 0.0, %v833
      %v835 = vpop.f32.mrb[0].mxu0
      %v836 = vpop.f32.mrb[0].mxu0
      %v837 = vadd.f32 0.0, %v836
      %v838 = vpop.f32.mrb[0].mxu0
      %839 = vmatprep.mubr.bf16.mxu0 0
      %840 = vmatmul.mubr.bf16.gmra.mrb[0].mxu0 %v603
      %v841 = vpop.f32.mrb[0].mxu0
      %v842 = vadd.f32 0.0, %v841
      %v843 = vpop.f32.mrb[0].mxu0
      %v844 = vpop.f32.mrb[0].mxu0
      %v845 = vadd.f32 0.0, %v844
      %v846 = vpop.f32.mrb[0].mxu0
      %847 = vmatprep.mubr.bf16.mxu0 0
      %848 = vmatmul.mubr.bf16.gmra.mrb[0].mxu0 %v606
      %v849 = vpop.f32.mrb[0].mxu0
      %v850 = vadd.f32 0.0, %v849
      %v851 = vpop.f32.mrb[0].mxu0
      %v852 = vpop.f32.mrb[0].mxu0
      %v853 = vadd.f32 0.0, %v852
      %v854 = vpop.f32.mrb[0].mxu0
      %855 = vmatprep.mubr.bf16.mxu0 0
      %856 = vmatmul.mubr.bf16.gmra.mrb[0].mxu0 %v609
      %v857 = vpop.f32.mrb[0].mxu0
      %v858 = vadd.f32 0.0, %v857
      %v859 = vpop.f32.mrb[0].mxu0
      %v860 = vpop.f32.mrb[0].mxu0
      %v861 = vadd.f32 0.0, %v860
      %v862 = vpop.f32.mrb[0].mxu0
      %863 = vmatprep.mubr.bf16.mxu0 0
      %864 = vmatmul.mubr.bf16.gmra.mrb[0].mxu0 %v612
      %v865 = vpop.f32.mrb[0].mxu0
      %v866 = vadd.f32 0.0, %v865
      %v867 = vpop.f32.mrb[0].mxu0
      %v868 = vpop.f32.mrb[0].mxu0
      %v869 = vadd.f32 0.0, %v868
      %v870 = vpop.f32.mrb[0].mxu0
      %871 = vmatprep.mubr.bf16.mxu0 0
      %872 = vmatmul.mubr.bf16.gmra.mrb[0].mxu0 %v615
      %v873 = vpop.f32.mrb[0].mxu0
      %v874 = vadd.f32 0.0, %v873
      %v875 = vpop.f32.mrb[0].mxu0
      %v876 = vpop.f32.mrb[0].mxu0
      %v877 = vadd.f32 0.0, %v876
      %v878 = vpop.f32.mrb[0].mxu0
      %879 = vmatprep.mubr.bf16.mxu0 0
      %880 = vmatmul.mubr.bf16.gmra.mrb[0].mxu0 %v618
      %v881 = vpop.f32.mrb[0].mxu0
      %v882 = vadd.f32 0.0, %v881
      %v883 = vpop.f32.mrb[0].mxu0
      %v884 = vpop.f32.mrb[0].mxu0
      %v885 = vadd.f32 0.0, %v884
      %v886 = vpop.f32.mrb[0].mxu0
      %887 = vmatprep.mubr.bf16.mxu0 0
      %888 = vmatmul.mubr.bf16.gmra.mrb[0].mxu0 %v621
      %v889 = vpop.f32.mrb[0].mxu0
      %v890 = vadd.f32 0.0, %v889
      %v891 = vpop.f32.mrb[0].mxu0
      %v892 = vpop.f32.mrb[0].mxu0
      %v893 = vadd.f32 0.0, %v892
      %v894 = vpop.f32.mrb[0].mxu0
      %895 = vmatprep.mubr.bf16.mxu0 0
      %896 = vmatmul.mubr.bf16.gmra.mrb[0].mxu0 %v624
      %v897 = vpop.f32.mrb[0].mxu0
      %v898 = vadd.f32 0.0, %v897
      %v899 = vpop.f32.mrb[0].mxu0
      %v900 = vpop.f32.mrb[0].mxu0
      %v901 = vadd.f32 0.0, %v900
      %v902 = vpop.f32.mrb[0].mxu0
      %903 = vmatprep.mubr.bf16.mxu0 0
      %904 = vmatmul.mubr.bf16.gmra.mrb[0].mxu0 %v627
      %v905 = vpop.f32.mrb[0].mxu0
      %v906 = vadd.f32 0.0, %v905
      %v907 = vpop.f32.mrb[0].mxu0
      %v908 = vpop.f32.mrb[0].mxu0
      %v909 = vadd.f32 0.0, %v908
      %v910 = vpop.f32.mrb[0].mxu0
      %911 = vmatprep.mubr.bf16.mxu0 0
      %912 = vmatmul.mubr.bf16.gmra.mrb[0].mxu0 %v630
      %v913 = vpop.f32.mrb[0].mxu0
      %v914 = vadd.f32 0.0, %v913
      %v915 = vpop.f32.mrb[0].mxu0
      %v916 = vpop.f32.mrb[0].mxu0
      %v917 = vadd.f32 0.0, %v916
      %v918 = vpop.f32.mrb[0].mxu0
      %919 = vmatprep.mubr.bf16.mxu0 0
      %920 = vmatmul.mubr.bf16.gmra.mrb[0].mxu0 %v633
      %v921 = vpop.f32.mrb[0].mxu0
      %v922 = vadd.f32 0.0, %v921
      %v923 = vpop.f32.mrb[0].mxu0
      %v924 = vpop.f32.mrb[0].mxu0
      %v925 = vadd.f32 0.0, %v924
      %v926 = vpop.f32.mrb[0].mxu0
      %927 = vdwg.mxu0
      %v992 = vunpack.c.l.b16 %v223
      %v993 = vunpack.c.l.b16 %v224
      %v994 = vunpack.c.l.b16 %v225
      %v995 = vunpack.c.l.b16 %v226
      %v996 = vunpack.c.l.b16 %v227
      %v997 = vunpack.c.l.b16 %v228
      %v998 = vunpack.c.l.b16 %v229
      %v999 = vunpack.c.l.b16 %v230
      %v1000 = vunpack.c.l.b16 %v231
      %v1001 = vunpack.c.l.b16 %v232
      %v1002 = vunpack.c.l.b16 %v233
      %v1003 = vunpack.c.l.b16 %v234
      %v1004 = vunpack.c.l.b16 %v235
      %v1005 = vunpack.c.l.b16 %v236
      %v1006 = vunpack.c.l.b16 %v237
      %v1007 = vunpack.c.l.b16 %v238
      %v1008 = vunpack.c.l.b16 %v239
      %v1009 = vunpack.c.l.b16 %v240
      %v1010 = vunpack.c.l.b16 %v241
      %v1011 = vunpack.c.l.b16 %v242
      %v1012 = vunpack.c.l.b16 %v243
      %v1013 = vunpack.c.l.b16 %v244
      %v1014 = vunpack.c.l.b16 %v245
      %v1015 = vunpack.c.l.b16 %v246
      %v1016 = vunpack.c.l.b16 %v247
      %v1017 = vunpack.c.l.b16 %v248
      %v1018 = vunpack.c.l.b16 %v249
      %v1019 = vunpack.c.l.b16 %v250
      %v1020 = vunpack.c.l.b16 %v251
      %v1021 = vunpack.c.l.b16 %v252
      %v1022 = vunpack.c.l.b16 %v253
      %v1023 = vunpack.c.l.b16 %v254
      %v1024 = vunpack.c.l.b16 %v255
      %v1025 = vunpack.c.l.b16 %v256
      %v1026 = vunpack.c.l.b16 %v257
      %v1027 = vunpack.c.l.b16 %v258
      %v1028 = vunpack.c.l.b16 %v259
      %v1029 = vunpack.c.l.b16 %v260
      %v1030 = vunpack.c.l.b16 %v261
      %v1031 = vunpack.c.l.b16 %v262
      %v1032 = vunpack.c.l.b16 %v263
      %v1033 = vunpack.c.l.b16 %v264
      %v1034 = vunpack.c.l.b16 %v265
      %v1035 = vunpack.c.l.b16 %v266
      %v1036 = vunpack.c.l.b16 %v267
      %v1037 = vunpack.c.l.b16 %v268
      %v1038 = vunpack.c.l.b16 %v269
      %v1039 = vunpack.c.l.b16 %v270
      %v1040 = vunpack.c.l.b16 %v271
      %v1041 = vunpack.c.l.b16 %v272
      %v1042 = vunpack.c.l.b16 %v273
      %v1043 = vunpack.c.l.b16 %v274
      %v1044 = vunpack.c.l.b16 %v275
      %v1045 = vunpack.c.l.b16 %v276
      %v1046 = vunpack.c.l.b16 %v277
      %v1047 = vunpack.c.l.b16 %v278
      %v1048 = vunpack.c.l.b16 %v279
      %v1049 = vunpack.c.l.b16 %v280
      %v1050 = vunpack.c.l.b16 %v281
      %v1051 = vunpack.c.l.b16 %v282
      %v1052 = vunpack.c.l.b16 %v283
      %v1053 = vunpack.c.l.b16 %v284
      %v1054 = vunpack.c.l.b16 %v285
      %v1055 = vunpack.c.l.b16 %v286
      %v1056 = vpack.c.b16 %v993, %v992
      %v1057 = vpack.c.b16 %v995, %v994
      %v1058 = vpack.c.b16 %v997, %v996
      %v1059 = vpack.c.b16 %v999, %v998
      %v1060 = vpack.c.b16 %v1001, %v1000
      %v1061 = vpack.c.b16 %v1003, %v1002
      %v1062 = vpack.c.b16 %v1005, %v1004
      %v1063 = vpack.c.b16 %v1007, %v1006
      %v1064 = vpack.c.b16 %v1009, %v1008
      %v1065 = vpack.c.b16 %v1011, %v1010
      %v1066 = vpack.c.b16 %v1013, %v1012
      %v1067 = vpack.c.b16 %v1015, %v1014
      %v1068 = vpack.c.b16 %v1017, %v1016
      %v1069 = vpack.c.b16 %v1019, %v1018
      %v1070 = vpack.c.b16 %v1021, %v1020
      %v1071 = vpack.c.b16 %v1023, %v1022
      %v1072 = vpack.c.b16 %v1025, %v1024
      %v1073 = vpack.c.b16 %v1027, %v1026
      %v1074 = vpack.c.b16 %v1029, %v1028
      %v1075 = vpack.c.b16 %v1031, %v1030
      %v1076 = vpack.c.b16 %v1033, %v1032
      %v1077 = vpack.c.b16 %v1035, %v1034
      %v1078 = vpack.c.b16 %v1037, %v1036
      %v1079 = vpack.c.b16 %v1039, %v1038
      %v1080 = vpack.c.b16 %v1041, %v1040
      %v1081 = vpack.c.b16 %v1043, %v1042
      %v1082 = vpack.c.b16 %v1045, %v1044
      %v1083 = vpack.c.b16 %v1047, %v1046
      %v1084 = vpack.c.b16 %v1049, %v1048
      %v1085 = vpack.c.b16 %v1051, %v1050
      %v1086 = vpack.c.b16 %v1053, %v1052
      %v1087 = vpack.c.b16 %v1055, %v1054
      %v1093 = vunpack.c.l.b16 %v287
      %v1094 = vunpack.c.l.b16 %v288
      %v1095 = vunpack.c.l.b16 %v289
      %v1096 = vunpack.c.l.b16 %v290
      %v1097 = vunpack.c.l.b16 %v291
      %v1098 = vpack.c.b16 %v1094, %v1093
      %v1099 = vpack.c.b16 %v1096, %v1095
      %v1100 = vpack.c.b16 %v1097, %v1097
      %v1104 = vsel %vm538, %v1056, 0
      %v1107 = vsel %vm538, %v1057, 0
      %v1110 = vsel %vm538, %v1058, 0
      %v1113 = vsel %vm538, %v1059, 0
      %v1116 = vsel %vm538, %v1060, 0
      %v1119 = vsel %vm538, %v1061, 0
      %v1122 = vsel %vm538, %v1062, 0
      %v1125 = vsel %vm538, %v1063, 0
      %v1128 = vsel %vm538, %v1064, 0
      %v1131 = vsel %vm538, %v1065, 0
      %v1134 = vsel %vm538, %v1066, 0
      %v1137 = vsel %vm538, %v1067, 0
      %v1140 = vsel %vm538, %v1068, 0
      %v1143 = vsel %vm538, %v1069, 0
      %v1146 = vsel %vm538, %v1070, 0
      %v1149 = vsel %vm538, %v1071, 0
      %v1152 = vsel %vm538, %v1072, 0
      %v1155 = vsel %vm538, %v1073, 0
      %v1158 = vsel %vm538, %v1074, 0
      %v1161 = vsel %vm538, %v1075, 0
      %v1164 = vsel %vm538, %v1076, 0
      %v1167 = vsel %vm538, %v1077, 0
      %v1170 = vsel %vm538, %v1078, 0
      %v1173 = vsel %vm538, %v1079, 0
      %v1176 = vsel %vm538, %v1080, 0
      %v1179 = vsel %vm538, %v1081, 0
      %v1182 = vsel %vm538, %v1082, 0
      %v1185 = vsel %vm538, %v1083, 0
      %v1188 = vsel %vm538, %v1084, 0
      %v1191 = vsel %vm538, %v1085, 0
      %v1194 = vsel %vm538, %v1086, 0
      %v1197 = vsel %vm538, %v1087, 0
      %v1200 = vsel %vm635, %v1100, 0
      %1202 = vmatprep.subr.bf16.mxu0 0
      %1203 = vmatpush1.bf16.msra.mxu0 %v1098
      %1204 = vmatprep.subr.bf16.mxu0 0
      %1205 = vmatpush1.bf16.msra.mxu0 %v1099
      %1206 = vmatprep.subr.bf16.mxu0 0
      %1207 = vmatpush1.bf16.msra.mxu0 %v1200
      %1208 = vmatprep.subr.bf16.mxu0 0
      %1209 = vmatpush1.bf16.msra.mxu0 0
      %1210 = vmatprep.subr.bf16.mxu0 0
      %1211 = vmatpush1.bf16.msra.mxu0 0
      %1212 = vmatprep.subr.bf16.mxu0 0
      %1213 = vmatpush1.bf16.msra.mxu0 0
      %1214 = vmatprep.subr.bf16.mxu0 0
      %1215 = vmatpush1.bf16.msra.mxu0 0
      %1216 = vmatprep.subr.bf16.mxu0 0
      %1217 = vmatpush1.bf16.msra.mxu0 0
      %1218 = vmatprep.subr.bf16.mxu0 0
      %1219 = vmatpush1.bf16.msra.mxu0 0
      %1220 = vmatprep.subr.bf16.mxu0 0
      %1221 = vmatpush1.bf16.msra.mxu0 0
      %1222 = vmatprep.subr.bf16.mxu0 0
      %1223 = vmatpush1.bf16.msra.mxu0 0
      %1224 = vmatprep.subr.bf16.mxu0 0
      %1225 = vmatpush1.bf16.msra.mxu0 0
      %1226 = vmatprep.subr.bf16.mxu0 0
      %1227 = vmatpush1.bf16.msra.mxu0 0
      %1228 = vmatprep.subr.bf16.mxu0 0
      %1229 = vmatpush1.bf16.msra.mxu0 0
      %1230 = vmatprep.subr.bf16.mxu0 0
      %1231 = vmatpush1.bf16.msra.mxu0 0
      %1232 = vmatprep.subr.bf16.mxu0 0
      %1233 = vmatpush1.bf16.msra.mxu0 0
      %1234 = vmatprep.mubr.bf16.mxu0 0
      %1235 = vmatmul.mubr.bf16.gmra.mrb[0].mxu0 %v1104
      %v1236 = vpop.f32.mrb[0].mxu0
      %v1237 = vadd.f32 %v674, %v1236
      %v1238 = vpop.f32.mrb[0].mxu0
      %v1239 = vpop.f32.mrb[0].mxu0
      %v1240 = vadd.f32 %v677, %v1239
      %v1241 = vpop.f32.mrb[0].mxu0
      %1242 = vmatprep.mubr.bf16.mxu0 0
      %1243 = vmatmul.mubr.bf16.gmra.mrb[0].mxu0 %v1107
      %v1244 = vpop.f32.mrb[0].mxu0
      %v1245 = vadd.f32 %v682, %v1244
      %v1246 = vpop.f32.mrb[0].mxu0
      %v1247 = vpop.f32.mrb[0].mxu0
      %v1248 = vadd.f32 %v685, %v1247
      %v1249 = vpop.f32.mrb[0].mxu0
      %1250 = vmatprep.mubr.bf16.mxu0 0
      %1251 = vmatmul.mubr.bf16.gmra.mrb[0].mxu0 %v1110
      %v1252 = vpop.f32.mrb[0].mxu0
      %v1253 = vadd.f32 %v690, %v1252
      %v1254 = vpop.f32.mrb[0].mxu0
      %v1255 = vpop.f32.mrb[0].mxu0
      %v1256 = vadd.f32 %v693, %v1255
      %v1257 = vpop.f32.mrb[0].mxu0
      %1258 = vmatprep.mubr.bf16.mxu0 0
      %1259 = vmatmul.mubr.bf16.gmra.mrb[0].mxu0 %v1113
      %v1260 = vpop.f32.mrb[0].mxu0
      %v1261 = vadd.f32 %v698, %v1260
      %v1262 = vpop.f32.mrb[0].mxu0
      %v1263 = vpop.f32.mrb[0].mxu0
      %v1264 = vadd.f32 %v701, %v1263
      %v1265 = vpop.f32.mrb[0].mxu0
      %1266 = vmatprep.mubr.bf16.mxu0 0
      %1267 = vmatmul.mubr.bf16.gmra.mrb[0].mxu0 %v1116
      %v1268 = vpop.f32.mrb[0].mxu0
      %v1269 = vadd.f32 %v706, %v1268
      %v1270 = vpop.f32.mrb[0].mxu0
      %v1271 = vpop.f32.mrb[0].mxu0
      %v1272 = vadd.f32 %v709, %v1271
      %v1273 = vpop.f32.mrb[0].mxu0
      %1274 = vmatprep.mubr.bf16.mxu0 0
      %1275 = vmatmul.mubr.bf16.gmra.mrb[0].mxu0 %v1119
      %v1276 = vpop.f32.mrb[0].mxu0
      %v1277 = vadd.f32 %v714, %v1276
      %v1278 = vpop.f32.mrb[0].mxu0
      %v1279 = vpop.f32.mrb[0].mxu0
      %v1280 = vadd.f32 %v717, %v1279
      %v1281 = vpop.f32.mrb[0].mxu0
      %1282 = vmatprep.mubr.bf16.mxu0 0
      %1283 = vmatmul.mubr.bf16.gmra.mrb[0].mxu0 %v1122
      %v1284 = vpop.f32.mrb[0].mxu0
      %v1285 = vadd.f32 %v722, %v1284
      %v1286 = vpop.f32.mrb[0].mxu0
      %v1287 = vpop.f32.mrb[0].mxu0
      %v1288 = vadd.f32 %v725, %v1287
      %v1289 = vpop.f32.mrb[0].mxu0
      %1290 = vmatprep.mubr.bf16.mxu0 0
      %1291 = vmatmul.mubr.bf16.gmra.mrb[0].mxu0 %v1125
      %v1292 = vpop.f32.mrb[0].mxu0
      %v1293 = vadd.f32 %v730, %v1292
      %v1294 = vpop.f32.mrb[0].mxu0
      %v1295 = vpop.f32.mrb[0].mxu0
      %v1296 = vadd.f32 %v733, %v1295
      %v1297 = vpop.f32.mrb[0].mxu0
      %1298 = vmatprep.mubr.bf16.mxu0 0
      %1299 = vmatmul.mubr.bf16.gmra.mrb[0].mxu0 %v1128
      %v1300 = vpop.f32.mrb[0].mxu0
      %v1301 = vadd.f32 %v738, %v1300
      %v1302 = vpop.f32.mrb[0].mxu0
      %v1303 = vpop.f32.mrb[0].mxu0
      %v1304 = vadd.f32 %v741, %v1303
      %v1305 = vpop.f32.mrb[0].mxu0
      %1306 = vmatprep.mubr.bf16.mxu0 0
      %1307 = vmatmul.mubr.bf16.gmra.mrb[0].mxu0 %v1131
      %v1308 = vpop.f32.mrb[0].mxu0
      %v1309 = vadd.f32 %v746, %v1308
      %v1310 = vpop.f32.mrb[0].mxu0
      %v1311 = vpop.f32.mrb[0].mxu0
      %v1312 = vadd.f32 %v749, %v1311
      %v1313 = vpop.f32.mrb[0].mxu0
      %1314 = vmatprep.mubr.bf16.mxu0 0
      %1315 = vmatmul.mubr.bf16.gmra.mrb[0].mxu0 %v1134
      %v1316 = vpop.f32.mrb[0].mxu0
      %v1317 = vadd.f32 %v754, %v1316
      %v1318 = vpop.f32.mrb[0].mxu0
      %v1319 = vpop.f32.mrb[0].mxu0
      %v1320 = vadd.f32 %v757, %v1319
      %v1321 = vpop.f32.mrb[0].mxu0
      %1322 = vmatprep.mubr.bf16.mxu0 0
      %1323 = vmatmul.mubr.bf16.gmra.mrb[0].mxu0 %v1137
      %v1324 = vpop.f32.mrb[0].mxu0
      %v1325 = vadd.f32 %v762, %v1324
      %v1326 = vpop.f32.mrb[0].mxu0
      %v1327 = vpop.f32.mrb[0].mxu0
      %v1328 = vadd.f32 %v765, %v1327
      %v1329 = vpop.f32.mrb[0].mxu0
      %1330 = vmatprep.mubr.bf16.mxu0 0
      %1331 = vmatmul.mubr.bf16.gmra.mrb[0].mxu0 %v1140
      %v1332 = vpop.f32.mrb[0].mxu0
      %v1333 = vadd.f32 %v770, %v1332
      %v1334 = vpop.f32.mrb[0].mxu0
      %v1335 = vpop.f32.mrb[0].mxu0
      %v1336 = vadd.f32 %v773, %v1335
      %v1337 = vpop.f32.mrb[0].mxu0
      %1338 = vmatprep.mubr.bf16.mxu0 0
      %1339 = vmatmul.mubr.bf16.gmra.mrb[0].mxu0 %v1143
      %v1340 = vpop.f32.mrb[0].mxu0
      %v1341 = vadd.f32 %v778, %v1340
      %v1342 = vpop.f32.mrb[0].mxu0
      %v1343 = vpop.f32.mrb[0].mxu0
      %v1344 = vadd.f32 %v781, %v1343
      %v1345 = vpop.f32.mrb[0].mxu0
      %1346 = vmatprep.mubr.bf16.mxu0 0
      %1347 = vmatmul.mubr.bf16.gmra.mrb[0].mxu0 %v1146
      %v1348 = vpop.f32.mrb[0].mxu0
      %v1349 = vadd.f32 %v786, %v1348
      %v1350 = vpop.f32.mrb[0].mxu0
      %v1351 = vpop.f32.mrb[0].mxu0
      %v1352 = vadd.f32 %v789, %v1351
      %v1353 = vpop.f32.mrb[0].mxu0
      %1354 = vmatprep.mubr.bf16.mxu0 0
      %1355 = vmatmul.mubr.bf16.gmra.mrb[0].mxu0 %v1149
      %v1356 = vpop.f32.mrb[0].mxu0
      %v1357 = vadd.f32 %v794, %v1356
      %v1358 = vpop.f32.mrb[0].mxu0
      %v1359 = vpop.f32.mrb[0].mxu0
      %v1360 = vadd.f32 %v797, %v1359
      %v1361 = vpop.f32.mrb[0].mxu0
      %1362 = vmatprep.mubr.bf16.mxu0 0
      %1363 = vmatmul.mubr.bf16.gmra.mrb[0].mxu0 %v1152
      %v1364 = vpop.f32.mrb[0].mxu0
      %v1365 = vadd.f32 %v802, %v1364
      %v1366 = vpop.f32.mrb[0].mxu0
      %v1367 = vpop.f32.mrb[0].mxu0
      %v1368 = vadd.f32 %v805, %v1367
      %v1369 = vpop.f32.mrb[0].mxu0
      %1370 = vmatprep.mubr.bf16.mxu0 0
      %1371 = vmatmul.mubr.bf16.gmra.mrb[0].mxu0 %v1155
      %v1372 = vpop.f32.mrb[0].mxu0
      %v1373 = vadd.f32 %v810, %v1372
      %v1374 = vpop.f32.mrb[0].mxu0
      %v1375 = vpop.f32.mrb[0].mxu0
      %v1376 = vadd.f32 %v813, %v1375
      %v1377 = vpop.f32.mrb[0].mxu0
      %1378 = vmatprep.mubr.bf16.mxu0 0
      %1379 = vmatmul.mubr.bf16.gmra.mrb[0].mxu0 %v1158
      %v1380 = vpop.f32.mrb[0].mxu0
      %v1381 = vadd.f32 %v818, %v1380
      %v1382 = vpop.f32.mrb[0].mxu0
      %v1383 = vpop.f32.mrb[0].mxu0
      %v1384 = vadd.f32 %v821, %v1383
      %v1385 = vpop.f32.mrb[0].mxu0
      %1386 = vmatprep.mubr.bf16.mxu0 0
      %1387 = vmatmul.mubr.bf16.gmra.mrb[0].mxu0 %v1161
      %v1388 = vpop.f32.mrb[0].mxu0
      %v1389 = vadd.f32 %v826, %v1388
      %v1390 = vpop.f32.mrb[0].mxu0
      %v1391 = vpop.f32.mrb[0].mxu0
      %v1392 = vadd.f32 %v829, %v1391
      %v1393 = vpop.f32.mrb[0].mxu0
      %1394 = vmatprep.mubr.bf16.mxu0 0
      %1395 = vmatmul.mubr.bf16.gmra.mrb[0].mxu0 %v1164
      %v1396 = vpop.f32.mrb[0].mxu0
      %v1397 = vadd.f32 %v834, %v1396
      %v1398 = vpop.f32.mrb[0].mxu0
      %v1399 = vpop.f32.mrb[0].mxu0
      %v1400 = vadd.f32 %v837, %v1399
      %v1401 = vpop.f32.mrb[0].mxu0
      %1402 = vmatprep.mubr.bf16.mxu0 0
      %1403 = vmatmul.mubr.bf16.gmra.mrb[0].mxu0 %v1167
      %v1404 = vpop.f32.mrb[0].mxu0
      %v1405 = vadd.f32 %v842, %v1404
      %v1406 = vpop.f32.mrb[0].mxu0
      %v1407 = vpop.f32.mrb[0].mxu0
      %v1408 = vadd.f32 %v845, %v1407
      %v1409 = vpop.f32.mrb[0].mxu0
      %1410 = vmatprep.mubr.bf16.mxu0 0
      %1411 = vmatmul.mubr.bf16.gmra.mrb[0].mxu0 %v1170
      %v1412 = vpop.f32.mrb[0].mxu0
      %v1413 = vadd.f32 %v850, %v1412
      %v1414 = vpop.f32.mrb[0].mxu0
      %v1415 = vpop.f32.mrb[0].mxu0
      %v1416 = vadd.f32 %v853, %v1415
      %v1417 = vpop.f32.mrb[0].mxu0
      %1418 = vmatprep.mubr.bf16.mxu0 0
      %1419 = vmatmul.mubr.bf16.gmra.mrb[0].mxu0 %v1173
      %v1420 = vpop.f32.mrb[0].mxu0
      %v1421 = vadd.f32 %v858, %v1420
      %v1422 = vpop.f32.mrb[0].mxu0
      %v1423 = vpop.f32.mrb[0].mxu0
      %v1424 = vadd.f32 %v861, %v1423
      %v1425 = vpop.f32.mrb[0].mxu0
      %1426 = vmatprep.mubr.bf16.mxu0 0
      %1427 = vmatmul.mubr.bf16.gmra.mrb[0].mxu0 %v1176
      %v1428 = vpop.f32.mrb[0].mxu0
      %v1429 = vadd.f32 %v866, %v1428
      %v1430 = vpop.f32.mrb[0].mxu0
      %v1431 = vpop.f32.mrb[0].mxu0
      %v1432 = vadd.f32 %v869, %v1431
      %v1433 = vpop.f32.mrb[0].mxu0
      %1434 = vmatprep.mubr.bf16.mxu0 0
      %1435 = vmatmul.mubr.bf16.gmra.mrb[0].mxu0 %v1179
      %v1436 = vpop.f32.mrb[0].mxu0
      %v1437 = vadd.f32 %v874, %v1436
      %v1438 = vpop.f32.mrb[0].mxu0
      %v1439 = vpop.f32.mrb[0].mxu0
      %v1440 = vadd.f32 %v877, %v1439
      %v1441 = vpop.f32.mrb[0].mxu0
      %1442 = vmatprep.mubr.bf16.mxu0 0
      %1443 = vmatmul.mubr.bf16.gmra.mrb[0].mxu0 %v1182
      %v1444 = vpop.f32.mrb[0].mxu0
      %v1445 = vadd.f32 %v882, %v1444
      %v1446 = vpop.f32.mrb[0].mxu0
      %v1447 = vpop.f32.mrb[0].mxu0
      %v1448 = vadd.f32 %v885, %v1447
      %v1449 = vpop.f32.mrb[0].mxu0
      %1450 = vmatprep.mubr.bf16.mxu0 0
      %1451 = vmatmul.mubr.bf16.gmra.mrb[0].mxu0 %v1185
      %v1452 = vpop.f32.mrb[0].mxu0
      %v1453 = vadd.f32 %v890, %v1452
      %v1454 = vpop.f32.mrb[0].mxu0
      %v1455 = vpop.f32.mrb[0].mxu0
      %v1456 = vadd.f32 %v893, %v1455
      %v1457 = vpop.f32.mrb[0].mxu0
      %1458 = vmatprep.mubr.bf16.mxu0 0
      %1459 = vmatmul.mubr.bf16.gmra.mrb[0].mxu0 %v1188
      %v1460 = vpop.f32.mrb[0].mxu0
      %v1461 = vadd.f32 %v898, %v1460
      %v1462 = vpop.f32.mrb[0].mxu0
      %v1463 = vpop.f32.mrb[0].mxu0
      %v1464 = vadd.f32 %v901, %v1463
      %v1465 = vpop.f32.mrb[0].mxu0
      %1466 = vmatprep.mubr.bf16.mxu0 0
      %1467 = vmatmul.mubr.bf16.gmra.mrb[0].mxu0 %v1191
      %v1468 = vpop.f32.mrb[0].mxu0
      %v1469 = vadd.f32 %v906, %v1468
      %v1470 = vpop.f32.mrb[0].mxu0
      %v1471 = vpop.f32.mrb[0].mxu0
      %v1472 = vadd.f32 %v909, %v1471
      %v1473 = vpop.f32.mrb[0].mxu0
      %1474 = vmatprep.mubr.bf16.mxu0 0
      %1475 = vmatmul.mubr.bf16.gmra.mrb[0].mxu0 %v1194
      %v1476 = vpop.f32.mrb[0].mxu0
      %v1477 = vadd.f32 %v914, %v1476
      %v1478 = vpop.f32.mrb[0].mxu0
      %v1479 = vpop.f32.mrb[0].mxu0
      %v1480 = vadd.f32 %v917, %v1479
      %v1481 = vpop.f32.mrb[0].mxu0
      %1482 = vmatprep.mubr.bf16.mxu0 0
      %1483 = vmatmul.mubr.bf16.gmra.mrb[0].mxu0 %v1197
      %v1484 = vpop.f32.mrb[0].mxu0
      %v1485 = vadd.f32 %v922, %v1484
      %v1486 = vpop.f32.mrb[0].mxu0
      %v1487 = vpop.f32.mrb[0].mxu0
      %v1488 = vadd.f32 %v925, %v1487
      %v1489 = vpop.f32.mrb[0].mxu0
      %1490 = vdwg.mxu0
      %s1491 = scalar_lea.vmem %s206, 64
      %v1492 = vld [vmem:[%s1491] sm:$0xf]
      %v1493 = vld [vmem:[%s1491 + $0x4] sm:$0xf]
      %v1494 = vld [vmem:[%s1491 + $0x8] sm:$0xf]
      %v1495 = vld [vmem:[%s1491 + $0xc] sm:$0xf]
      %v1496 = vld [vmem:[%s1491 + $0x10] sm:$0xf]
      %v1497 = vld [vmem:[%s1491 + $0x14] sm:$0xf]
      %v1498 = vld [vmem:[%s1491 + $0x18] sm:$0xf]
      %v1499 = vld [vmem:[%s1491 + $0x1c] sm:$0xf]
      %v1500 = vld [vmem:[%s1491 + $0x20] sm:$0xf]
      %v1501 = vld [vmem:[%s1491 + $0x24] sm:$0xf]
      %v1502 = vld [vmem:[%s1491 + $0x28] sm:$0xf]
      %v1503 = vld [vmem:[%s1491 + $0x2c] sm:$0xf]
      %v1504 = vld [vmem:[%s1491 + $0x30] sm:$0xf]
      %v1505 = vld [vmem:[%s1491 + $0x34] sm:$0xf]
      %v1506 = vld [vmem:[%s1491 + $0x38] sm:$0xf]
      %v1507 = vld [vmem:[%s1491 + $0x3c] sm:$0xf]
      %v1508 = vld [vmem:[%s1491 + $0x40] sm:$0xf]
      %v1509 = vld [vmem:[%s1491 + $0x44] sm:$0xf]
      %v1510 = vld [vmem:[%s1491 + $0x48] sm:$0xf]
      %v1511 = vld [vmem:[%s1491 + $0x4c] sm:$0xf]
      %v1512 = vld [vmem:[%s1491 + $0x50] sm:$0xf]
      %v1513 = vld [vmem:[%s1491 + $0x54] sm:$0xf]
      %v1514 = vld [vmem:[%s1491 + $0x58] sm:$0xf]
      %v1515 = vld [vmem:[%s1491 + $0x5c] sm:$0xf]
      %v1516 = vld [vmem:[%s1491 + $0x60] sm:$0xf]
      %v1517 = vld [vmem:[%s1491 + $0x64] sm:$0xf]
      %v1518 = vld [vmem:[%s1491 + $0x68] sm:$0xf]
      %v1519 = vld [vmem:[%s1491 + $0x6c] sm:$0xf]
      %v1520 = vld [vmem:[%s1491 + $0x70] sm:$0xf]
      %v1521 = vld [vmem:[%s1491 + $0x74] sm:$0xf]
      %v1522 = vld [vmem:[%s1491 + $0x78] sm:$0xf]
      %v1523 = vld [vmem:[%s1491 + $0x7c] sm:$0xf]
      %v1524 = vld [vmem:[%s1491 + $0x80] sm:$0xf]
      %v1525 = vld [vmem:[%s1491 + $0x84] sm:$0xf]
      %v1526 = vld [vmem:[%s1491 + $0x88] sm:$0xf]
      %v1527 = vld [vmem:[%s1491 + $0x8c] sm:$0xf]
      %v1528 = vld [vmem:[%s1491 + $0x90] sm:$0xf]
      %v1529 = vld [vmem:[%s1491 + $0x94] sm:$0xf]
      %v1530 = vld [vmem:[%s1491 + $0x98] sm:$0xf]
      %v1531 = vld [vmem:[%s1491 + $0x9c] sm:$0xf]
      %v1532 = vld [vmem:[%s1491 + $0xa0] sm:$0xf]
      %v1533 = vld [vmem:[%s1491 + $0xa4] sm:$0xf]
      %v1534 = vld [vmem:[%s1491 + $0xa8] sm:$0xf]
      %v1535 = vld [vmem:[%s1491 + $0xac] sm:$0xf]
      %v1536 = vld [vmem:[%s1491 + $0xb0] sm:$0xf]
      %v1537 = vld [vmem:[%s1491 + $0xb4] sm:$0xf]
      %v1538 = vld [vmem:[%s1491 + $0xb8] sm:$0xf]
      %v1539 = vld [vmem:[%s1491 + $0xbc] sm:$0xf]
      %v1540 = vld [vmem:[%s1491 + $0xc0] sm:$0xf]
      %v1541 = vld [vmem:[%s1491 + $0xc4] sm:$0xf]
      %v1542 = vld [vmem:[%s1491 + $0xc8] sm:$0xf]
      %v1543 = vld [vmem:[%s1491 + $0xcc] sm:$0xf]
      %v1544 = vld [vmem:[%s1491 + $0xd0] sm:$0xf]
      %v1545 = vld [vmem:[%s1491 + $0xd4] sm:$0xf]
      %v1546 = vld [vmem:[%s1491 + $0xd8] sm:$0xf]
      %v1547 = vld [vmem:[%s1491 + $0xdc] sm:$0xf]
      %v1548 = vld [vmem:[%s1491 + $0xe0] sm:$0xf]
      %v1549 = vld [vmem:[%s1491 + $0xe4] sm:$0xf]
      %v1550 = vld [vmem:[%s1491 + $0xe8] sm:$0xf]
      %v1551 = vld [vmem:[%s1491 + $0xec] sm:$0xf]
      %v1552 = vld [vmem:[%s1491 + $0xf0] sm:$0xf]
      %v1553 = vld [vmem:[%s1491 + $0xf4] sm:$0xf]
      %v1554 = vld [vmem:[%s1491 + $0xf8] sm:$0xf]
      %v1555 = vld [vmem:[%s1491 + $0xfc] sm:$0xf]
      %s1556 = scalar_lea.vmem %s1, 40
      %v1557 = vld [vmem:[%s1556] sm:$0xf]
      %v1558 = vld [vmem:[%s1556 + $0x4] sm:$0xf]
      %v1559 = vld [vmem:[%s1556 + $0x8] sm:$0xf]
      %v1560 = vld [vmem:[%s1556 + $0xc] sm:$0xf]
      %v1561 = vld [vmem:[%s1556 + $0x10] sm:$0x3]
      %v1626 = vunpack.c.l.b16 %v1492
      %v1627 = vunpack.c.l.b16 %v1493
      %v1628 = vunpack.c.l.b16 %v1494
      %v1629 = vunpack.c.l.b16 %v1495
      %v1630 = vunpack.c.l.b16 %v1496
      %v1631 = vunpack.c.l.b16 %v1497
      %v1632 = vunpack.c.l.b16 %v1498
      %v1633 = vunpack.c.l.b16 %v1499
      %v1634 = vunpack.c.l.b16 %v1500
      %v1635 = vunpack.c.l.b16 %v1501
      %v1636 = vunpack.c.l.b16 %v1502
      %v1637 = vunpack.c.l.b16 %v1503
      %v1638 = vunpack.c.l.b16 %v1504
      %v1639 = vunpack.c.l.b16 %v1505
      %v1640 = vunpack.c.l.b16 %v1506
      %v1641 = vunpack.c.l.b16 %v1507
      %v1642 = vunpack.c.l.b16 %v1508
      %v1643 = vunpack.c.l.b16 %v1509
      %v1644 = vunpack.c.l.b16 %v1510
      %v1645 = vunpack.c.l.b16 %v1511
      %v1646 = vunpack.c.l.b16 %v1512
      %v1647 = vunpack.c.l.b16 %v1513
      %v1648 = vunpack.c.l.b16 %v1514
      %v1649 = vunpack.c.l.b16 %v1515
      %v1650 = vunpack.c.l.b16 %v1516
      %v1651 = vunpack.c.l.b16 %v1517
      %v1652 = vunpack.c.l.b16 %v1518
      %v1653 = vunpack.c.l.b16 %v1519
      %v1654 = vunpack.c.l.b16 %v1520
      %v1655 = vunpack.c.l.b16 %v1521
      %v1656 = vunpack.c.l.b16 %v1522
      %v1657 = vunpack.c.l.b16 %v1523
      %v1658 = vunpack.c.l.b16 %v1524
      %v1659 = vunpack.c.l.b16 %v1525
      %v1660 = vunpack.c.l.b16 %v1526
      %v1661 = vunpack.c.l.b16 %v1527
      %v1662 = vunpack.c.l.b16 %v1528
      %v1663 = vunpack.c.l.b16 %v1529
      %v1664 = vunpack.c.l.b16 %v1530
      %v1665 = vunpack.c.l.b16 %v1531
      %v1666 = vunpack.c.l.b16 %v1532
      %v1667 = vunpack.c.l.b16 %v1533
      %v1668 = vunpack.c.l.b16 %v1534
      %v1669 = vunpack.c.l.b16 %v1535
      %v1670 = vunpack.c.l.b16 %v1536
      %v1671 = vunpack.c.l.b16 %v1537
      %v1672 = vunpack.c.l.b16 %v1538
      %v1673 = vunpack.c.l.b16 %v1539
      %v1674 = vunpack.c.l.b16 %v1540
      %v1675 = vunpack.c.l.b16 %v1541
      %v1676 = vunpack.c.l.b16 %v1542
      %v1677 = vunpack.c.l.b16 %v1543
      %v1678 = vunpack.c.l.b16 %v1544
      %v1679 = vunpack.c.l.b16 %v1545
      %v1680 = vunpack.c.l.b16 %v1546
      %v1681 = vunpack.c.l.b16 %v1547
      %v1682 = vunpack.c.l.b16 %v1548
      %v1683 = vunpack.c.l.b16 %v1549
      %v1684 = vunpack.c.l.b16 %v1550
      %v1685 = vunpack.c.l.b16 %v1551
      %v1686 = vunpack.c.l.b16 %v1552
      %v1687 = vunpack.c.l.b16 %v1553
      %v1688 = vunpack.c.l.b16 %v1554
      %v1689 = vunpack.c.l.b16 %v1555
      %v1690 = vpack.c.b16 %v1627, %v1626
      %v1691 = vpack.c.b16 %v1629, %v1628
      %v1692 = vpack.c.b16 %v1631, %v1630
      %v1693 = vpack.c.b16 %v1633, %v1632
      %v1694 = vpack.c.b16 %v1635, %v1634
      %v1695 = vpack.c.b16 %v1637, %v1636
      %v1696 = vpack.c.b16 %v1639, %v1638
      %v1697 = vpack.c.b16 %v1641, %v1640
      %v1698 = vpack.c.b16 %v1643, %v1642
      %v1699 = vpack.c.b16 %v1645, %v1644
      %v1700 = vpack.c.b16 %v1647, %v1646
      %v1701 = vpack.c.b16 %v1649, %v1648
      %v1702 = vpack.c.b16 %v1651, %v1650
      %v1703 = vpack.c.b16 %v1653, %v1652
      %v1704 = vpack.c.b16 %v1655, %v1654
      %v1705 = vpack.c.b16 %v1657, %v1656
      %v1706 = vpack.c.b16 %v1659, %v1658
      %v1707 = vpack.c.b16 %v1661, %v1660
      %v1708 = vpack.c.b16 %v1663, %v1662
      %v1709 = vpack.c.b16 %v1665, %v1664
      %v1710 = vpack.c.b16 %v1667, %v1666
      %v1711 = vpack.c.b16 %v1669, %v1668
      %v1712 = vpack.c.b16 %v1671, %v1670
      %v1713 = vpack.c.b16 %v1673, %v1672
      %v1714 = vpack.c.b16 %v1675, %v1674
      %v1715 = vpack.c.b16 %v1677, %v1676
      %v1716 = vpack.c.b16 %v1679, %v1678
      %v1717 = vpack.c.b16 %v1681, %v1680
      %v1718 = vpack.c.b16 %v1683, %v1682
      %v1719 = vpack.c.b16 %v1685, %v1684
      %v1720 = vpack.c.b16 %v1687, %v1686
      %v1721 = vpack.c.b16 %v1689, %v1688
      %v1727 = vunpack.c.l.b16 %v1557
      %v1728 = vunpack.c.l.b16 %v1558
      %v1729 = vunpack.c.l.b16 %v1559
      %v1730 = vunpack.c.l.b16 %v1560
      %v1731 = vunpack.c.l.b16 %v1561
      %v1732 = vpack.c.b16 %v1728, %v1727
      %v1733 = vpack.c.b16 %v1730, %v1729
      %v1734 = vpack.c.b16 %v1731, %v1731
      %v1738 = vsel %vm538, %v1690, 0
      %v1741 = vsel %vm538, %v1691, 0
      %v1744 = vsel %vm538, %v1692, 0
      %v1747 = vsel %vm538, %v1693, 0
      %v1750 = vsel %vm538, %v1694, 0
      %v1753 = vsel %vm538, %v1695, 0
      %v1756 = vsel %vm538, %v1696, 0
      %v1759 = vsel %vm538, %v1697, 0
      %v1762 = vsel %vm538, %v1698, 0
      %v1765 = vsel %vm538, %v1699, 0
      %v1768 = vsel %vm538, %v1700, 0
      %v1771 = vsel %vm538, %v1701, 0
      %v1774 = vsel %vm538, %v1702, 0
      %v1777 = vsel %vm538, %v1703, 0
      %v1780 = vsel %vm538, %v1704, 0
      %v1783 = vsel %vm538, %v1705, 0
      %v1786 = vsel %vm538, %v1706, 0
      %v1789 = vsel %vm538, %v1707, 0
      %v1792 = vsel %vm538, %v1708, 0
      %v1795 = vsel %vm538, %v1709, 0
      %v1798 = vsel %vm538, %v1710, 0
      %v1801 = vsel %vm538, %v1711, 0
      %v1804 = vsel %vm538, %v1712, 0
      %v1807 = vsel %vm538, %v1713, 0
      %v1810 = vsel %vm538, %v1714, 0
      %v1813 = vsel %vm538, %v1715, 0
      %v1816 = vsel %vm538, %v1716, 0
      %v1819 = vsel %vm538, %v1717, 0
      %v1822 = vsel %vm538, %v1718, 0
      %v1825 = vsel %vm538, %v1719, 0
      %v1828 = vsel %vm538, %v1720, 0
      %v1831 = vsel %vm538, %v1721, 0
      %v1834 = vsel %vm635, %v1734, 0
      %1836 = vmatprep.subr.bf16.mxu0 0
      %1837 = vmatpush1.bf16.msra.mxu0 %v1732
      %1838 = vmatprep.subr.bf16.mxu0 0
      %1839 = vmatpush1.bf16.msra.mxu0 %v1733
      %1840 = vmatprep.subr.bf16.mxu0 0
      %1841 = vmatpush1.bf16.msra.mxu0 %v1834
      %1842 = vmatprep.subr.bf16.mxu0 0
      %1843 = vmatpush1.bf16.msra.mxu0 0
      %1844 = vmatprep.subr.bf16.mxu0 0
      %1845 = vmatpush1.bf16.msra.mxu0 0
      %1846 = vmatprep.subr.bf16.mxu0 0
      %1847 = vmatpush1.bf16.msra.mxu0 0
      %1848 = vmatprep.subr.bf16.mxu0 0
      %1849 = vmatpush1.bf16.msra.mxu0 0
      %1850 = vmatprep.subr.bf16.mxu0 0
      %1851 = vmatpush1.bf16.msra.mxu0 0
      %1852 = vmatprep.subr.bf16.mxu0 0
      %1853 = vmatpush1.bf16.msra.mxu0 0
      %1854 = vmatprep.subr.bf16.mxu0 0
      %1855 = vmatpush1.bf16.msra.mxu0 0
      %1856 = vmatprep.subr.bf16.mxu0 0
      %1857 = vmatpush1.bf16.msra.mxu0 0
      %1858 = vmatprep.subr.bf16.mxu0 0
      %1859 = vmatpush1.bf16.msra.mxu0 0
      %1860 = vmatprep.subr.bf16.mxu0 0
      %1861 = vmatpush1.bf16.msra.mxu0 0
      %1862 = vmatprep.subr.bf16.mxu0 0
      %1863 = vmatpush1.bf16.msra.mxu0 0
      %1864 = vmatprep.subr.bf16.mxu0 0
      %1865 = vmatpush1.bf16.msra.mxu0 0
      %1866 = vmatprep.subr.bf16.mxu0 0
      %1867 = vmatpush1.bf16.msra.mxu0 0
      %1868 = vmatprep.mubr.bf16.mxu0 0
      %1869 = vmatmul.mubr.bf16.gmra.mrb[0].mxu0 %v1738
      %v1870 = vpop.f32.mrb[0].mxu0
      %v1871 = vadd.f32 0.0, %v1870
      %v1872 = vpop.f32.mrb[0].mxu0
      %v1873 = vpop.f32.mrb[0].mxu0
      %v1874 = vadd.f32 0.0, %v1873
      %v1875 = vpop.f32.mrb[0].mxu0
      %1876 = vmatprep.mubr.bf16.mxu0 0
      %1877 = vmatmul.mubr.bf16.gmra.mrb[0].mxu0 %v1741
      %v1878 = vpop.f32.mrb[0].mxu0
      %v1879 = vadd.f32 0.0, %v1878
      %v1880 = vpop.f32.mrb[0].mxu0
      %v1881 = vpop.f32.mrb[0].mxu0
      %v1882 = vadd.f32 0.0, %v1881
      %v1883 = vpop.f32.mrb[0].mxu0
      %1884 = vmatprep.mubr.bf16.mxu0 0
      %1885 = vmatmul.mubr.bf16.gmra.mrb[0].mxu0 %v1744
      %v1886 = vpop.f32.mrb[0].mxu0
      %v1887 = vadd.f32 0.0, %v1886
      %v1888 = vpop.f32.mrb[0].mxu0
      %v1889 = vpop.f32.mrb[0].mxu0
      %v1890 = vadd.f32 0.0, %v1889
      %v1891 = vpop.f32.mrb[0].mxu0
      %1892 = vmatprep.mubr.bf16.mxu0 0
      %1893 = vmatmul.mubr.bf16.gmra.mrb[0].mxu0 %v1747
      %v1894 = vpop.f32.mrb[0].mxu0
      %v1895 = vadd.f32 0.0, %v1894
      %v1896 = vpop.f32.mrb[0].mxu0
      %v1897 = vpop.f32.mrb[0].mxu0
      %v1898 = vadd.f32 0.0, %v1897
      %v1899 = vpop.f32.mrb[0].mxu0
      %1900 = vmatprep.mubr.bf16.mxu0 0
      %1901 = vmatmul.mubr.bf16.gmra.mrb[0].mxu0 %v1750
      %v1902 = vpop.f32.mrb[0].mxu0
      %v1903 = vadd.f32 0.0, %v1902
      %v1904 = vpop.f32.mrb[0].mxu0
      %v1905 = vpop.f32.mrb[0].mxu0
      %v1906 = vadd.f32 0.0, %v1905
      %v1907 = vpop.f32.mrb[0].mxu0
      %1908 = vmatprep.mubr.bf16.mxu0 0
      %1909 = vmatmul.mubr.bf16.gmra.mrb[0].mxu0 %v1753
      %v1910 = vpop.f32.mrb[0].mxu0
      %v1911 = vadd.f32 0.0, %v1910
      %v1912 = vpop.f32.mrb[0].mxu0
      %v1913 = vpop.f32.mrb[0].mxu0
      %v1914 = vadd.f32 0.0, %v1913
      %v1915 = vpop.f32.mrb[0].mxu0
      %1916 = vmatprep.mubr.bf16.mxu0 0
      %1917 = vmatmul.mubr.bf16.gmra.mrb[0].mxu0 %v1756
      %v1918 = vpop.f32.mrb[0].mxu0
      %v1919 = vadd.f32 0.0, %v1918
      %v1920 = vpop.f32.mrb[0].mxu0
      %v1921 = vpop.f32.mrb[0].mxu0
      %v1922 = vadd.f32 0.0, %v1921
      %v1923 = vpop.f32.mrb[0].mxu0
      %1924 = vmatprep.mubr.bf16.mxu0 0
      %1925 = vmatmul.mubr.bf16.gmra.mrb[0].mxu0 %v1759
      %v1926 = vpop.f32.mrb[0].mxu0
      %v1927 = vadd.f32 0.0, %v1926
      %v1928 = vpop.f32.mrb[0].mxu0
      %v1929 = vpop.f32.mrb[0].mxu0
      %v1930 = vadd.f32 0.0, %v1929
      %v1931 = vpop.f32.mrb[0].mxu0
      %1932 = vmatprep.mubr.bf16.mxu0 0
      %1933 = vmatmul.mubr.bf16.gmra.mrb[0].mxu0 %v1762
      %v1934 = vpop.f32.mrb[0].mxu0
      %v1935 = vadd.f32 0.0, %v1934
      %v1936 = vpop.f32.mrb[0].mxu0
      %v1937 = vpop.f32.mrb[0].mxu0
      %v1938 = vadd.f32 0.0, %v1937
      %v1939 = vpop.f32.mrb[0].mxu0
      %1940 = vmatprep.mubr.bf16.mxu0 0
      %1941 = vmatmul.mubr.bf16.gmra.mrb[0].mxu0 %v1765
      %v1942 = vpop.f32.mrb[0].mxu0
      %v1943 = vadd.f32 0.0, %v1942
      %v1944 = vpop.f32.mrb[0].mxu0
      %v1945 = vpop.f32.mrb[0].mxu0
      %v1946 = vadd.f32 0.0, %v1945
      %v1947 = vpop.f32.mrb[0].mxu0
      %1948 = vmatprep.mubr.bf16.mxu0 0
      %1949 = vmatmul.mubr.bf16.gmra.mrb[0].mxu0 %v1768
      %v1950 = vpop.f32.mrb[0].mxu0
      %v1951 = vadd.f32 0.0, %v1950
      %v1952 = vpop.f32.mrb[0].mxu0
      %v1953 = vpop.f32.mrb[0].mxu0
      %v1954 = vadd.f32 0.0, %v1953
      %v1955 = vpop.f32.mrb[0].mxu0
      %1956 = vmatprep.mubr.bf16.mxu0 0
      %1957 = vmatmul.mubr.bf16.gmra.mrb[0].mxu0 %v1771
      %v1958 = vpop.f32.mrb[0].mxu0
      %v1959 = vadd.f32 0.0, %v1958
      %v1960 = vpop.f32.mrb[0].mxu0
      %v1961 = vpop.f32.mrb[0].mxu0
      %v1962 = vadd.f32 0.0, %v1961
      %v1963 = vpop.f32.mrb[0].mxu0
      %1964 = vmatprep.mubr.bf16.mxu0 0
      %1965 = vmatmul.mubr.bf16.gmra.mrb[0].mxu0 %v1774
      %v1966 = vpop.f32.mrb[0].mxu0
      %v1967 = vadd.f32 0.0, %v1966
      %v1968 = vpop.f32.mrb[0].mxu0
      %v1969 = vpop.f32.mrb[0].mxu0
      %v1970 = vadd.f32 0.0, %v1969
      %v1971 = vpop.f32.mrb[0].mxu0
      %1972 = vmatprep.mubr.bf16.mxu0 0
      %1973 = vmatmul.mubr.bf16.gmra.mrb[0].mxu0 %v1777
      %v1974 = vpop.f32.mrb[0].mxu0
      %v1975 = vadd.f32 0.0, %v1974
      %v1976 = vpop.f32.mrb[0].mxu0
      %v1977 = vpop.f32.mrb[0].mxu0
      %v1978 = vadd.f32 0.0, %v1977
      %v1979 = vpop.f32.mrb[0].mxu0
      %1980 = vmatprep.mubr.bf16.mxu0 0
      %1981 = vmatmul.mubr.bf16.gmra.mrb[0].mxu0 %v1780
      %v1982 = vpop.f32.mrb[0].mxu0
      %v1983 = vadd.f32 0.0, %v1982
      %v1984 = vpop.f32.mrb[0].mxu0
      %v1985 = vpop.f32.mrb[0].mxu0
      %v1986 = vadd.f32 0.0, %v1985
      %v1987 = vpop.f32.mrb[0].mxu0
      %1988 = vmatprep.mubr.bf16.mxu0 0
      %1989 = vmatmul.mubr.bf16.gmra.mrb[0].mxu0 %v1783
      %v1990 = vpop.f32.mrb[0].mxu0
      %v1991 = vadd.f32 0.0, %v1990
      %v1992 = vpop.f32.mrb[0].mxu0
      %v1993 = vpop.f32.mrb[0].mxu0
      %v1994 = vadd.f32 0.0, %v1993
      %v1995 = vpop.f32.mrb[0].mxu0
      %1996 = vmatprep.mubr.bf16.mxu0 0
      %1997 = vmatmul.mubr.bf16.gmra.mrb[0].mxu0 %v1786
      %v1998 = vpop.f32.mrb[0].mxu0
      %v1999 = vadd.f32 0.0, %v1998
      %v2000 = vpop.f32.mrb[0].mxu0
      %v2001 = vpop.f32.mrb[0].mxu0
      %v2002 = vadd.f32 0.0, %v2001
      %v2003 = vpop.f32.mrb[0].mxu0
      %2004 = vmatprep.mubr.bf16.mxu0 0
      %2005 = vmatmul.mubr.bf16.gmra.mrb[0].mxu0 %v1789
      %v2006 = vpop.f32.mrb[0].mxu0
      %v2007 = vadd.f32 0.0, %v2006
      %v2008 = vpop.f32.mrb[0].mxu0
      %v2009 = vpop.f32.mrb[0].mxu0
      %v2010 = vadd.f32 0.0, %v2009
      %v2011 = vpop.f32.mrb[0].mxu0
      %2012 = vmatprep.mubr.bf16.mxu0 0
      %2013 = vmatmul.mubr.bf16.gmra.mrb[0].mxu0 %v1792
      %v2014 = vpop.f32.mrb[0].mxu0
      %v2015 = vadd.f32 0.0, %v2014
      %v2016 = vpop.f32.mrb[0].mxu0
      %v2017 = vpop.f32.mrb[0].mxu0
      %v2018 = vadd.f32 0.0, %v2017
      %v2019 = vpop.f32.mrb[0].mxu0
      %2020 = vmatprep.mubr.bf16.mxu0 0
      %2021 = vmatmul.mubr.bf16.gmra.mrb[0].mxu0 %v1795
      %v2022 = vpop.f32.mrb[0].mxu0
      %v2023 = vadd.f32 0.0, %v2022
      %v2024 = vpop.f32.mrb[0].mxu0
      %v2025 = vpop.f32.mrb[0].mxu0
      %v2026 = vadd.f32 0.0, %v2025
      %v2027 = vpop.f32.mrb[0].mxu0
      %2028 = vmatprep.mubr.bf16.mxu0 0
      %2029 = vmatmul.mubr.bf16.gmra.mrb[0].mxu0 %v1798
      %v2030 = vpop.f32.mrb[0].mxu0
      %v2031 = vadd.f32 0.0, %v2030
      %v2032 = vpop.f32.mrb[0].mxu0
      %v2033 = vpop.f32.mrb[0].mxu0
      %v2034 = vadd.f32 0.0, %v2033
      %v2035 = vpop.f32.mrb[0].mxu0
      %2036 = vmatprep.mubr.bf16.mxu0 0
      %2037 = vmatmul.mubr.bf16.gmra.mrb[0].mxu0 %v1801
      %v2038 = vpop.f32.mrb[0].mxu0
      %v2039 = vadd.f32 0.0, %v2038
      %v2040 = vpop.f32.mrb[0].mxu0
      %v2041 = vpop.f32.mrb[0].mxu0
      %v2042 = vadd.f32 0.0, %v2041
      %v2043 = vpop.f32.mrb[0].mxu0
      %2044 = vmatprep.mubr.bf16.mxu0 0
      %2045 = vmatmul.mubr.bf16.gmra.mrb[0].mxu0 %v1804
      %v2046 = vpop.f32.mrb[0].mxu0
      %v2047 = vadd.f32 0.0, %v2046
      %v2048 = vpop.f32.mrb[0].mxu0
      %v2049 = vpop.f32.mrb[0].mxu0
      %v2050 = vadd.f32 0.0, %v2049
      %v2051 = vpop.f32.mrb[0].mxu0
      %2052 = vmatprep.mubr.bf16.mxu0 0
      %2053 = vmatmul.mubr.bf16.gmra.mrb[0].mxu0 %v1807
      %v2054 = vpop.f32.mrb[0].mxu0
      %v2055 = vadd.f32 0.0, %v2054
      %v2056 = vpop.f32.mrb[0].mxu0
      %v2057 = vpop.f32.mrb[0].mxu0
      %v2058 = vadd.f32 0.0, %v2057
      %v2059 = vpop.f32.mrb[0].mxu0
      %2060 = vmatprep.mubr.bf16.mxu0 0
      %2061 = vmatmul.mubr.bf16.gmra.mrb[0].mxu0 %v1810
      %v2062 = vpop.f32.mrb[0].mxu0
      %v2063 = vadd.f32 0.0, %v2062
      %v2064 = vpop.f32.mrb[0].mxu0
      %v2065 = vpop.f32.mrb[0].mxu0
      %v2066 = vadd.f32 0.0, %v2065
      %v2067 = vpop.f32.mrb[0].mxu0
      %2068 = vmatprep.mubr.bf16.mxu0 0
      %2069 = vmatmul.mubr.bf16.gmra.mrb[0].mxu0 %v1813
      %v2070 = vpop.f32.mrb[0].mxu0
      %v2071 = vadd.f32 0.0, %v2070
      %v2072 = vpop.f32.mrb[0].mxu0
      %v2073 = vpop.f32.mrb[0].mxu0
      %v2074 = vadd.f32 0.0, %v2073
      %v2075 = vpop.f32.mrb[0].mxu0
      %2076 = vmatprep.mubr.bf16.mxu0 0
      %2077 = vmatmul.mubr.bf16.gmra.mrb[0].mxu0 %v1816
      %v2078 = vpop.f32.mrb[0].mxu0
      %v2079 = vadd.f32 0.0, %v2078
      %v2080 = vpop.f32.mrb[0].mxu0
      %v2081 = vpop.f32.mrb[0].mxu0
      %v2082 = vadd.f32 0.0, %v2081
      %v2083 = vpop.f32.mrb[0].mxu0
      %2084 = vmatprep.mubr.bf16.mxu0 0
      %2085 = vmatmul.mubr.bf16.gmra.mrb[0].mxu0 %v1819
      %v2086 = vpop.f32.mrb[0].mxu0
      %v2087 = vadd.f32 0.0, %v2086
      %v2088 = vpop.f32.mrb[0].mxu0
      %v2089 = vpop.f32.mrb[0].mxu0
      %v2090 = vadd.f32 0.0, %v2089
      %v2091 = vpop.f32.mrb[0].mxu0
      %2092 = vmatprep.mubr.bf16.mxu0 0
      %2093 = vmatmul.mubr.bf16.gmra.mrb[0].mxu0 %v1822
      %v2094 = vpop.f32.mrb[0].mxu0
      %v2095 = vadd.f32 0.0, %v2094
      %v2096 = vpop.f32.mrb[0].mxu0
      %v2097 = vpop.f32.mrb[0].mxu0
      %v2098 = vadd.f32 0.0, %v2097
      %v2099 = vpop.f32.mrb[0].mxu0
      %2100 = vmatprep.mubr.bf16.mxu0 0
      %2101 = vmatmul.mubr.bf16.gmra.mrb[0].mxu0 %v1825
      %v2102 = vpop.f32.mrb[0].mxu0
      %v2103 = vadd.f32 0.0, %v2102
      %v2104 = vpop.f32.mrb[0].mxu0
      %v2105 = vpop.f32.mrb[0].mxu0
      %v2106 = vadd.f32 0.0, %v2105
      %v2107 = vpop.f32.mrb[0].mxu0
      %2108 = vmatprep.mubr.bf16.mxu0 0
      %2109 = vmatmul.mubr.bf16.gmra.mrb[0].mxu0 %v1828
      %v2110 = vpop.f32.mrb[0].mxu0
      %v2111 = vadd.f32 0.0, %v2110
      %v2112 = vpop.f32.mrb[0].mxu0
      %v2113 = vpop.f32.mrb[0].mxu0
      %v2114 = vadd.f32 0.0, %v2113
      %v2115 = vpop.f32.mrb[0].mxu0
      %2116 = vmatprep.mubr.bf16.mxu0 0
      %2117 = vmatmul.mubr.bf16.gmra.mrb[0].mxu0 %v1831
      %v2118 = vpop.f32.mrb[0].mxu0
      %v2119 = vadd.f32 0.0, %v2118
      %v2120 = vpop.f32.mrb[0].mxu0
      %v2121 = vpop.f32.mrb[0].mxu0
      %v2122 = vadd.f32 0.0, %v2121
      %v2123 = vpop.f32.mrb[0].mxu0
      %2124 = vdwg.mxu0
      %v2125 = vadd.f32 %v1237, %v1871
      %v2126 = vadd.f32 %v1240, %v1874
      %v2127 = vadd.f32 %v1245, %v1879
      %v2128 = vadd.f32 %v1248, %v1882
      %v2129 = vadd.f32 %v1253, %v1887
      %v2130 = vadd.f32 %v1256, %v1890
      %v2131 = vadd.f32 %v1261, %v1895
      %v2132 = vadd.f32 %v1264, %v1898
      %v2133 = vadd.f32 %v1269, %v1903
      %v2134 = vadd.f32 %v1272, %v1906
      %v2135 = vadd.f32 %v1277, %v1911
      %v2136 = vadd.f32 %v1280, %v1914
      %v2137 = vadd.f32 %v1285, %v1919
      %v2138 = vadd.f32 %v1288, %v1922
      %v2139 = vadd.f32 %v1293, %v1927
      %v2140 = vadd.f32 %v1296, %v1930
      %v2141 = vadd.f32 %v1301, %v1935
      %v2142 = vadd.f32 %v1304, %v1938
      %v2143 = vadd.f32 %v1309, %v1943
      %v2144 = vadd.f32 %v1312, %v1946
      %v2145 = vadd.f32 %v1317, %v1951
      %v2146 = vadd.f32 %v1320, %v1954
      %v2147 = vadd.f32 %v1325, %v1959
      %v2148 = vadd.f32 %v1328, %v1962
      %v2149 = vadd.f32 %v1333, %v1967
      %v2150 = vadd.f32 %v1336, %v1970
      %v2151 = vadd.f32 %v1341, %v1975
      %v2152 = vadd.f32 %v1344, %v1978
      %v2153 = vadd.f32 %v1349, %v1983
      %v2154 = vadd.f32 %v1352, %v1986
      %v2155 = vadd.f32 %v1357, %v1991
      %v2156 = vadd.f32 %v1360, %v1994
      %v2157 = vadd.f32 %v1365, %v1999
      %v2158 = vadd.f32 %v1368, %v2002
      %v2159 = vadd.f32 %v1373, %v2007
      %v2160 = vadd.f32 %v1376, %v2010
      %v2161 = vadd.f32 %v1381, %v2015
      %v2162 = vadd.f32 %v1384, %v2018
      %v2163 = vadd.f32 %v1389, %v2023
      %v2164 = vadd.f32 %v1392, %v2026
      %v2165 = vadd.f32 %v1397, %v2031
      %v2166 = vadd.f32 %v1400, %v2034
      %v2167 = vadd.f32 %v1405, %v2039
      %v2168 = vadd.f32 %v1408, %v2042
      %v2169 = vadd.f32 %v1413, %v2047
      %v2170 = vadd.f32 %v1416, %v2050
      %v2171 = vadd.f32 %v1421, %v2055
      %v2172 = vadd.f32 %v1424, %v2058
      %v2173 = vadd.f32 %v1429, %v2063
      %v2174 = vadd.f32 %v1432, %v2066
      %v2175 = vadd.f32 %v1437, %v2071
      %v2176 = vadd.f32 %v1440, %v2074
      %v2177 = vadd.f32 %v1445, %v2079
      %v2178 = vadd.f32 %v1448, %v2082
      %v2179 = vadd.f32 %v1453, %v2087
      %v2180 = vadd.f32 %v1456, %v2090
      %v2181 = vadd.f32 %v1461, %v2095
      %v2182 = vadd.f32 %v1464, %v2098
      %v2183 = vadd.f32 %v1469, %v2103
      %v2184 = vadd.f32 %v1472, %v2106
      %v2185 = vadd.f32 %v1477, %v2111
      %v2186 = vadd.f32 %v1480, %v2114
      %v2187 = vadd.f32 %v1485, %v2119
      %v2188 = vadd.f32 %v1488, %v2122
      %v2189 = vpack.c.bf16 %v2126, %v2125
      %v2190 = vpack.c.bf16 %v2128, %v2127
      %v2191 = vpack.c.bf16 %v2130, %v2129
      %v2192 = vpack.c.bf16 %v2132, %v2131
      %v2193 = vpack.c.bf16 %v2134, %v2133
      %v2194 = vpack.c.bf16 %v2136, %v2135
      %v2195 = vpack.c.bf16 %v2138, %v2137
      %v2196 = vpack.c.bf16 %v2140, %v2139
      %v2197 = vpack.c.bf16 %v2142, %v2141
      %v2198 = vpack.c.bf16 %v2144, %v2143
      %v2199 = vpack.c.bf16 %v2146, %v2145
      %v2200 = vpack.c.bf16 %v2148, %v2147
      %v2201 = vpack.c.bf16 %v2150, %v2149
      %v2202 = vpack.c.bf16 %v2152, %v2151
      %v2203 = vpack.c.bf16 %v2154, %v2153
      %v2204 = vpack.c.bf16 %v2156, %v2155
      %v2205 = vpack.c.bf16 %v2158, %v2157
      %v2206 = vpack.c.bf16 %v2160, %v2159
      %v2207 = vpack.c.bf16 %v2162, %v2161
      %v2208 = vpack.c.bf16 %v2164, %v2163
      %v2209 = vpack.c.bf16 %v2166, %v2165
      %v2210 = vpack.c.bf16 %v2168, %v2167
      %v2211 = vpack.c.bf16 %v2170, %v2169
      %v2212 = vpack.c.bf16 %v2172, %v2171
      %v2213 = vpack.c.bf16 %v2174, %v2173
      %v2214 = vpack.c.bf16 %v2176, %v2175
      %v2215 = vpack.c.bf16 %v2178, %v2177
      %v2216 = vpack.c.bf16 %v2180, %v2179
      %v2217 = vpack.c.bf16 %v2182, %v2181
      %v2218 = vpack.c.bf16 %v2184, %v2183
      %v2219 = vpack.c.bf16 %v2186, %v2185
      %v2220 = vpack.c.bf16 %v2188, %v2187
      %v2253 = vunpack.c.l.b16 %v2189
      %v2254 = vunpack.c.h.b16 %v2189
      %v2255 = vunpack.c.l.b16 %v2190
      %v2256 = vunpack.c.h.b16 %v2190
      %v2257 = vunpack.c.l.b16 %v2191
      %v2258 = vunpack.c.h.b16 %v2191
      %v2259 = vunpack.c.l.b16 %v2192
      %v2260 = vunpack.c.h.b16 %v2192
      %v2261 = vunpack.c.l.b16 %v2193
      %v2262 = vunpack.c.h.b16 %v2193
      %v2263 = vunpack.c.l.b16 %v2194
      %v2264 = vunpack.c.h.b16 %v2194
      %v2265 = vunpack.c.l.b16 %v2195
      %v2266 = vunpack.c.h.b16 %v2195
      %v2267 = vunpack.c.l.b16 %v2196
      %v2268 = vunpack.c.h.b16 %v2196
      %v2269 = vunpack.c.l.b16 %v2197
      %v2270 = vunpack.c.h.b16 %v2197
      %v2271 = vunpack.c.l.b16 %v2198
      %v2272 = vunpack.c.h.b16 %v2198
      %v2273 = vunpack.c.l.b16 %v2199
      %v2274 = vunpack.c.h.b16 %v2199
      %v2275 = vunpack.c.l.b16 %v2200
      %v2276 = vunpack.c.h.b16 %v2200
      %v2277 = vunpack.c.l.b16 %v2201
      %v2278 = vunpack.c.h.b16 %v2201
      %v2279 = vunpack.c.l.b16 %v2202
      %v2280 = vunpack.c.h.b16 %v2202
      %v2281 = vunpack.c.l.b16 %v2203
      %v2282 = vunpack.c.h.b16 %v2203
      %v2283 = vunpack.c.l.b16 %v2204
      %v2284 = vunpack.c.h.b16 %v2204
      %v2285 = vunpack.c.l.b16 %v2205
      %v2286 = vunpack.c.h.b16 %v2205
      %v2287 = vunpack.c.l.b16 %v2206
      %v2288 = vunpack.c.h.b16 %v2206
      %v2289 = vunpack.c.l.b16 %v2207
      %v2290 = vunpack.c.h.b16 %v2207
      %v2291 = vunpack.c.l.b16 %v2208
      %v2292 = vunpack.c.h.b16 %v2208
      %v2293 = vunpack.c.l.b16 %v2209
      %v2294 = vunpack.c.h.b16 %v2209
      %v2295 = vunpack.c.l.b16 %v2210
      %v2296 = vunpack.c.h.b16 %v2210
      %v2297 = vunpack.c.l.b16 %v2211
      %v2298 = vunpack.c.h.b16 %v2211
      %v2299 = vunpack.c.l.b16 %v2212
      %v2300 = vunpack.c.h.b16 %v2212
      %v2301 = vunpack.c.l.b16 %v2213
      %v2302 = vunpack.c.h.b16 %v2213
      %v2303 = vunpack.c.l.b16 %v2214
      %v2304 = vunpack.c.h.b16 %v2214
      %v2305 = vunpack.c.l.b16 %v2215
      %v2306 = vunpack.c.h.b16 %v2215
      %v2307 = vunpack.c.l.b16 %v2216
      %v2308 = vunpack.c.h.b16 %v2216
      %v2309 = vunpack.c.l.b16 %v2217
      %v2310 = vunpack.c.h.b16 %v2217
      %v2311 = vunpack.c.l.b16 %v2218
      %v2312 = vunpack.c.h.b16 %v2218
      %v2313 = vunpack.c.l.b16 %v2219
      %v2314 = vunpack.c.h.b16 %v2219
      %v2315 = vunpack.c.l.b16 %v2220
      %v2316 = vunpack.c.h.b16 %v2220
      %v2317 = vpack.c.b16 %v2253, %v2253
      %v2318 = vpack.c.b16 %v2254, %v2254
      %v2319 = vpack.c.b16 %v2255, %v2255
      %v2320 = vpack.c.b16 %v2256, %v2256
      %v2321 = vpack.c.b16 %v2257, %v2257
      %v2322 = vpack.c.b16 %v2258, %v2258
      %v2323 = vpack.c.b16 %v2259, %v2259
      %v2324 = vpack.c.b16 %v2260, %v2260
      %v2325 = vpack.c.b16 %v2261, %v2261
      %v2326 = vpack.c.b16 %v2262, %v2262
      %v2327 = vpack.c.b16 %v2263, %v2263
      %v2328 = vpack.c.b16 %v2264, %v2264
      %v2329 = vpack.c.b16 %v2265, %v2265
      %v2330 = vpack.c.b16 %v2266, %v2266
      %v2331 = vpack.c.b16 %v2267, %v2267
      %v2332 = vpack.c.b16 %v2268, %v2268
      %v2333 = vpack.c.b16 %v2269, %v2269
      %v2334 = vpack.c.b16 %v2270, %v2270
      %v2335 = vpack.c.b16 %v2271, %v2271
      %v2336 = vpack.c.b16 %v2272, %v2272
      %v2337 = vpack.c.b16 %v2273, %v2273
      %v2338 = vpack.c.b16 %v2274, %v2274
      %v2339 = vpack.c.b16 %v2275, %v2275
      %v2340 = vpack.c.b16 %v2276, %v2276
      %v2341 = vpack.c.b16 %v2277, %v2277
      %v2342 = vpack.c.b16 %v2278, %v2278
      %v2343 = vpack.c.b16 %v2279, %v2279
      %v2344 = vpack.c.b16 %v2280, %v2280
      %v2345 = vpack.c.b16 %v2281, %v2281
      %v2346 = vpack.c.b16 %v2282, %v2282
      %v2347 = vpack.c.b16 %v2283, %v2283
      %v2348 = vpack.c.b16 %v2284, %v2284
      %v2349 = vpack.c.b16 %v2285, %v2285
      %v2350 = vpack.c.b16 %v2286, %v2286
      %v2351 = vpack.c.b16 %v2287, %v2287
      %v2352 = vpack.c.b16 %v2288, %v2288
      %v2353 = vpack.c.b16 %v2289, %v2289
      %v2354 = vpack.c.b16 %v2290, %v2290
      %v2355 = vpack.c.b16 %v2291, %v2291
      %v2356 = vpack.c.b16 %v2292, %v2292
      %v2357 = vpack.c.b16 %v2293, %v2293
      %v2358 = vpack.c.b16 %v2294, %v2294
      %v2359 = vpack.c.b16 %v2295, %v2295
      %v2360 = vpack.c.b16 %v2296, %v2296
      %v2361 = vpack.c.b16 %v2297, %v2297
      %v2362 = vpack.c.b16 %v2298, %v2298
      %v2363 = vpack.c.b16 %v2299, %v2299
      %v2364 = vpack.c.b16 %v2300, %v2300
      %v2365 = vpack.c.b16 %v2301, %v2301
      %v2366 = vpack.c.b16 %v2302, %v2302
      %v2367 = vpack.c.b16 %v2303, %v2303
      %v2368 = vpack.c.b16 %v2304, %v2304
      %v2369 = vpack.c.b16 %v2305, %v2305
      %v2370 = vpack.c.b16 %v2306, %v2306
      %v2371 = vpack.c.b16 %v2307, %v2307
      %v2372 = vpack.c.b16 %v2308, %v2308
      %v2373 = vpack.c.b16 %v2309, %v2309
      %v2374 = vpack.c.b16 %v2310, %v2310
      %v2375 = vpack.c.b16 %v2311, %v2311
      %v2376 = vpack.c.b16 %v2312, %v2312
      %v2377 = vpack.c.b16 %v2313, %v2313
      %v2378 = vpack.c.b16 %v2314, %v2314
      %v2379 = vpack.c.b16 %v2315, %v2315
      %v2380 = vpack.c.b16 %v2316, %v2316
      %vm2445 = vcmask 125952
      %2446 = vst.msk [vmem:[%s212] sm:$0xf] %vm2445, %v2317
      %2447 = vst.msk [vmem:[%s212 + $0x4] sm:$0xf] %vm2445, %v2318
      %2448 = vst.msk [vmem:[%s212 + $0x8] sm:$0xf] %vm2445, %v2319
      %2449 = vst.msk [vmem:[%s212 + $0xc] sm:$0xf] %vm2445, %v2320
      %2450 = vst.msk [vmem:[%s212 + $0x10] sm:$0xf] %vm2445, %v2321
      %2451 = vst.msk [vmem:[%s212 + $0x14] sm:$0xf] %vm2445, %v2322
      %2452 = vst.msk [vmem:[%s212 + $0x18] sm:$0xf] %vm2445, %v2323
      %2453 = vst.msk [vmem:[%s212 + $0x1c] sm:$0xf] %vm2445, %v2324
      %2454 = vst.msk [vmem:[%s212 + $0x20] sm:$0xf] %vm2445, %v2325
      %2455 = vst.msk [vmem:[%s212 + $0x24] sm:$0xf] %vm2445, %v2326
      %2456 = vst.msk [vmem:[%s212 + $0x28] sm:$0xf] %vm2445, %v2327
      %2457 = vst.msk [vmem:[%s212 + $0x2c] sm:$0xf] %vm2445, %v2328
      %2458 = vst.msk [vmem:[%s212 + $0x30] sm:$0xf] %vm2445, %v2329
      %2459 = vst.msk [vmem:[%s212 + $0x34] sm:$0xf] %vm2445, %v2330
      %2460 = vst.msk [vmem:[%s212 + $0x38] sm:$0xf] %vm2445, %v2331
      %2461 = vst.msk [vmem:[%s212 + $0x3c] sm:$0xf] %vm2445, %v2332
      %2462 = vst.msk [vmem:[%s212 + $0x40] sm:$0xf] %vm2445, %v2333
      %2463 = vst.msk [vmem:[%s212 + $0x44] sm:$0xf] %vm2445, %v2334
      %2464 = vst.msk [vmem:[%s212 + $0x48] sm:$0xf] %vm2445, %v2335
      %2465 = vst.msk [vmem:[%s212 + $0x4c] sm:$0xf] %vm2445, %v2336
      %2466 = vst.msk [vmem:[%s212 + $0x50] sm:$0xf] %vm2445, %v2337
      %2467 = vst.msk [vmem:[%s212 + $0x54] sm:$0xf] %vm2445, %v2338
      %2468 = vst.msk [vmem:[%s212 + $0x58] sm:$0xf] %vm2445, %v2339
      %2469 = vst.msk [vmem:[%s212 + $0x5c] sm:$0xf] %vm2445, %v2340
      %2470 = vst.msk [vmem:[%s212 + $0x60] sm:$0xf] %vm2445, %v2341
      %2471 = vst.msk [vmem:[%s212 + $0x64] sm:$0xf] %vm2445, %v2342
      %2472 = vst.msk [vmem:[%s212 + $0x68] sm:$0xf] %vm2445, %v2343
      %2473 = vst.msk [vmem:[%s212 + $0x6c] sm:$0xf] %vm2445, %v2344
      %2474 = vst.msk [vmem:[%s212 + $0x70] sm:$0xf] %vm2445, %v2345
      %2475 = vst.msk [vmem:[%s212 + $0x74] sm:$0xf] %vm2445, %v2346
      %2476 = vst.msk [vmem:[%s212 + $0x78] sm:$0xf] %vm2445, %v2347
      %2477 = vst.msk [vmem:[%s212 + $0x7c] sm:$0xf] %vm2445, %v2348
      %2478 = vst.msk [vmem:[%s212 + $0x80] sm:$0xf] %vm2445, %v2349
      %2479 = vst.msk [vmem:[%s212 + $0x84] sm:$0xf] %vm2445, %v2350
      %2480 = vst.msk [vmem:[%s212 + $0x88] sm:$0xf] %vm2445, %v2351
      %2481 = vst.msk [vmem:[%s212 + $0x8c] sm:$0xf] %vm2445, %v2352
      %2482 = vst.msk [vmem:[%s212 + $0x90] sm:$0xf] %vm2445, %v2353
      %2483 = vst.msk [vmem:[%s212 + $0x94] sm:$0xf] %vm2445, %v2354
      %2484 = vst.msk [vmem:[%s212 + $0x98] sm:$0xf] %vm2445, %v2355
      %2485 = vst.msk [vmem:[%s212 + $0x9c] sm:$0xf] %vm2445, %v2356
      %2486 = vst.msk [vmem:[%s212 + $0xa0] sm:$0xf] %vm2445, %v2357
      %2487 = vst.msk [vmem:[%s212 + $0xa4] sm:$0xf] %vm2445, %v2358
      %2488 = vst.msk [vmem:[%s212 + $0xa8] sm:$0xf] %vm2445, %v2359
      %2489 = vst.msk [vmem:[%s212 + $0xac] sm:$0xf] %vm2445, %v2360
      %2490 = vst.msk [vmem:[%s212 + $0xb0] sm:$0xf] %vm2445, %v2361
      %2491 = vst.msk [vmem:[%s212 + $0xb4] sm:$0xf] %vm2445, %v2362
      %2492 = vst.msk [vmem:[%s212 + $0xb8] sm:$0xf] %vm2445, %v2363
      %2493 = vst.msk [vmem:[%s212 + $0xbc] sm:$0xf] %vm2445, %v2364
      %2494 = vst.msk [vmem:[%s212 + $0xc0] sm:$0xf] %vm2445, %v2365
      %2495 = vst.msk [vmem:[%s212 + $0xc4] sm:$0xf] %vm2445, %v2366
      %2496 = vst.msk [vmem:[%s212 + $0xc8] sm:$0xf] %vm2445, %v2367
      %2497 = vst.msk [vmem:[%s212 + $0xcc] sm:$0xf] %vm2445, %v2368
      %2498 = vst.msk [vmem:[%s212 + $0xd0] sm:$0xf] %vm2445, %v2369
      %2499 = vst.msk [vmem:[%s212 + $0xd4] sm:$0xf] %vm2445, %v2370
      %2500 = vst.msk [vmem:[%s212 + $0xd8] sm:$0xf] %vm2445, %v2371
      %2501 = vst.msk [vmem:[%s212 + $0xdc] sm:$0xf] %vm2445, %v2372
      %2502 = vst.msk [vmem:[%s212 + $0xe0] sm:$0xf] %vm2445, %v2373
      %2503 = vst.msk [vmem:[%s212 + $0xe4] sm:$0xf] %vm2445, %v2374
      %2504 = vst.msk [vmem:[%s212 + $0xe8] sm:$0xf] %vm2445, %v2375
      %2505 = vst.msk [vmem:[%s212 + $0xec] sm:$0xf] %vm2445, %v2376
      %2506 = vst.msk [vmem:[%s212 + $0xf0] sm:$0xf] %vm2445, %v2377
      %2507 = vst.msk [vmem:[%s212 + $0xf4] sm:$0xf] %vm2445, %v2378
      %2508 = vst.msk [vmem:[%s212 + $0xf8] sm:$0xf] %vm2445, %v2379
      %2509 = vst.msk [vmem:[%s212 + $0xfc] sm:$0xf] %vm2445, %v2380
      %vm2510 = vcmask 130048
      %v2511 = vsel %vm2510, %v2125, 0.0
      %v2512 = vsel %vm2510, %v2126, 0.0
      %v2513 = vadd.f32 %v2511, %v2512
      %v2514 = vsel %vm2510, %v2127, 0.0
      %v2515 = vadd.f32 %v2513, %v2514
      %v2516 = vsel %vm2510, %v2128, 0.0
      %v2517 = vadd.f32 %v2515, %v2516
      %v2518 = vsel %vm2510, %v2129, 0.0
      %v2519 = vadd.f32 %v2517, %v2518
      %v2520 = vsel %vm2510, %v2130, 0.0
      %v2521 = vadd.f32 %v2519, %v2520
      %v2522 = vsel %vm2510, %v2131, 0.0
      %v2523 = vadd.f32 %v2521, %v2522
      %v2524 = vsel %vm2510, %v2132, 0.0
      %v2525 = vadd.f32 %v2523, %v2524
      %v2526 = vsel %vm2510, %v2133, 0.0
      %v2527 = vadd.f32 %v2525, %v2526
      %v2528 = vsel %vm2510, %v2134, 0.0
      %v2529 = vadd.f32 %v2527, %v2528
      %v2530 = vsel %vm2510, %v2135, 0.0
      %v2531 = vadd.f32 %v2529, %v2530
      %v2532 = vsel %vm2510, %v2136, 0.0
      %v2533 = vadd.f32 %v2531, %v2532
      %v2534 = vsel %vm2510, %v2137, 0.0
      %v2535 = vadd.f32 %v2533, %v2534
      %v2536 = vsel %vm2510, %v2138, 0.0
      %v2537 = vadd.f32 %v2535, %v2536
      %v2538 = vsel %vm2510, %v2139, 0.0
      %v2539 = vadd.f32 %v2537, %v2538
      %v2540 = vsel %vm2510, %v2140, 0.0
      %v2541 = vadd.f32 %v2539, %v2540
      %v2542 = vsel %vm2510, %v2141, 0.0
      %v2543 = vadd.f32 %v2541, %v2542
      %v2544 = vsel %vm2510, %v2142, 0.0
      %v2545 = vadd.f32 %v2543, %v2544
      %v2546 = vsel %vm2510, %v2143, 0.0
      %v2547 = vadd.f32 %v2545, %v2546
      %v2548 = vsel %vm2510, %v2144, 0.0
      %v2549 = vadd.f32 %v2547, %v2548
      %v2550 = vsel %vm2510, %v2145, 0.0
      %v2551 = vadd.f32 %v2549, %v2550
      %v2552 = vsel %vm2510, %v2146, 0.0
      %v2553 = vadd.f32 %v2551, %v2552
      %v2554 = vsel %vm2510, %v2147, 0.0
      %v2555 = vadd.f32 %v2553, %v2554
      %v2556 = vsel %vm2510, %v2148, 0.0
      %v2557 = vadd.f32 %v2555, %v2556
      %v2558 = vsel %vm2510, %v2149, 0.0
      %v2559 = vadd.f32 %v2557, %v2558
      %v2560 = vsel %vm2510, %v2150, 0.0
      %v2561 = vadd.f32 %v2559, %v2560
      %v2562 = vsel %vm2510, %v2151, 0.0
      %v2563 = vadd.f32 %v2561, %v2562
      %v2564 = vsel %vm2510, %v2152, 0.0
      %v2565 = vadd.f32 %v2563, %v2564
      %v2566 = vsel %vm2510, %v2153, 0.0
      %v2567 = vadd.f32 %v2565, %v2566
      %v2568 = vsel %vm2510, %v2154, 0.0
      %v2569 = vadd.f32 %v2567, %v2568
      %v2570 = vsel %vm2510, %v2155, 0.0
      %v2571 = vadd.f32 %v2569, %v2570
      %v2572 = vsel %vm2510, %v2156, 0.0
      %v2573 = vadd.f32 %v2571, %v2572
      %v2574 = vsel %vm2510, %v2157, 0.0
      %v2575 = vadd.f32 %v2573, %v2574
      %v2576 = vsel %vm2510, %v2158, 0.0
      %v2577 = vadd.f32 %v2575, %v2576
      %v2578 = vsel %vm2510, %v2159, 0.0
      %v2579 = vadd.f32 %v2577, %v2578
      %v2580 = vsel %vm2510, %v2160, 0.0
      %v2581 = vadd.f32 %v2579, %v2580
      %v2582 = vsel %vm2510, %v2161, 0.0
      %v2583 = vadd.f32 %v2581, %v2582
      %v2584 = vsel %vm2510, %v2162, 0.0
      %v2585 = vadd.f32 %v2583, %v2584
      %v2586 = vsel %vm2510, %v2163, 0.0
      %v2587 = vadd.f32 %v2585, %v2586
      %v2588 = vsel %vm2510, %v2164, 0.0
      %v2589 = vadd.f32 %v2587, %v2588
      %v2590 = vsel %vm2510, %v2165, 0.0
      %v2591 = vadd.f32 %v2589, %v2590
      %v2592 = vsel %vm2510, %v2166, 0.0
      %v2593 = vadd.f32 %v2591, %v2592
      %v2594 = vsel %vm2510, %v2167, 0.0
      %v2595 = vadd.f32 %v2593, %v2594
      %v2596 = vsel %vm2510, %v2168, 0.0
      %v2597 = vadd.f32 %v2595, %v2596
      %v2598 = vsel %vm2510, %v2169, 0.0
      %v2599 = vadd.f32 %v2597, %v2598
      %v2600 = vsel %vm2510, %v2170, 0.0
      %v2601 = vadd.f32 %v2599, %v2600
      %v2602 = vsel %vm2510, %v2171, 0.0
      %v2603 = vadd.f32 %v2601, %v2602
      %v2604 = vsel %vm2510, %v2172, 0.0
      %v2605 = vadd.f32 %v2603, %v2604
      %v2606 = vsel %vm2510, %v2173, 0.0
      %v2607 = vadd.f32 %v2605, %v2606
      %v2608 = vsel %vm2510, %v2174, 0.0
      %v2609 = vadd.f32 %v2607, %v2608
      %v2610 = vsel %vm2510, %v2175, 0.0
      %v2611 = vadd.f32 %v2609, %v2610
      %v2612 = vsel %vm2510, %v2176, 0.0
      %v2613 = vadd.f32 %v2611, %v2612
      %v2614 = vsel %vm2510, %v2177, 0.0
      %v2615 = vadd.f32 %v2613, %v2614
      %v2616 = vsel %vm2510, %v2178, 0.0
      %v2617 = vadd.f32 %v2615, %v2616
      %v2618 = vsel %vm2510, %v2179, 0.0
      %v2619 = vadd.f32 %v2617, %v2618
      %v2620 = vsel %vm2510, %v2180, 0.0
      %v2621 = vadd.f32 %v2619, %v2620
      %v2622 = vsel %vm2510, %v2181, 0.0
      %v2623 = vadd.f32 %v2621, %v2622
      %v2624 = vsel %vm2510, %v2182, 0.0
      %v2625 = vadd.f32 %v2623, %v2624
      %v2626 = vsel %vm2510, %v2183, 0.0
      %v2627 = vadd.f32 %v2625, %v2626
      %v2628 = vsel %vm2510, %v2184, 0.0
      %v2629 = vadd.f32 %v2627, %v2628
      %v2630 = vsel %vm2510, %v2185, 0.0
      %v2631 = vadd.f32 %v2629, %v2630
      %v2632 = vsel %vm2510, %v2186, 0.0
      %v2633 = vadd.f32 %v2631, %v2632
      %v2634 = vsel %vm2510, %v2187, 0.0
      %v2635 = vadd.f32 %v2633, %v2634
      %v2636 = vsel %vm2510, %v2188, 0.0
      %v2637 = vadd.f32 %v2635, %v2636
      %v2638 = vrot.slane %v2637, 4
      %v2639 = vadd.f32 %v2637, %v2638
      %v2640 = vrot.slane %v2639, 2
      %v2641 = vadd.f32 %v2639, %v2640
      %v2642 = vrot.slane %v2641, 1
      %v2643 = vadd.f32 %v2641, %v2642
      %v2644 = vmul.f32 %v2643, 0.001953125
      %v2645 = vsub.f32 %v2125, %v2644
      %v2646 = vsub.f32 %v2126, %v2644
      %v2647 = vsub.f32 %v2127, %v2644
      %v2648 = vsub.f32 %v2128, %v2644
      %v2649 = vsub.f32 %v2129, %v2644
      %v2650 = vsub.f32 %v2130, %v2644
      %v2651 = vsub.f32 %v2131, %v2644
      %v2652 = vsub.f32 %v2132, %v2644
      %v2653 = vsub.f32 %v2133, %v2644
      %v2654 = vsub.f32 %v2134, %v2644
      %v2655 = vsub.f32 %v2135, %v2644
      %v2656 = vsub.f32 %v2136, %v2644
      %v2657 = vsub.f32 %v2137, %v2644
      %v2658 = vsub.f32 %v2138, %v2644
      %v2659 = vsub.f32 %v2139, %v2644
      %v2660 = vsub.f32 %v2140, %v2644
      %v2661 = vsub.f32 %v2141, %v2644
      %v2662 = vsub.f32 %v2142, %v2644
      %v2663 = vsub.f32 %v2143, %v2644
      %v2664 = vsub.f32 %v2144, %v2644
      %v2665 = vsub.f32 %v2145, %v2644
      %v2666 = vsub.f32 %v2146, %v2644
      %v2667 = vsub.f32 %v2147, %v2644
      %v2668 = vsub.f32 %v2148, %v2644
      %v2669 = vsub.f32 %v2149, %v2644
      %v2670 = vsub.f32 %v2150, %v2644
      %v2671 = vsub.f32 %v2151, %v2644
      %v2672 = vsub.f32 %v2152, %v2644
      %v2673 = vsub.f32 %v2153, %v2644
      %v2674 = vsub.f32 %v2154, %v2644
      %v2675 = vsub.f32 %v2155, %v2644
      %v2676 = vsub.f32 %v2156, %v2644
      %v2677 = vsub.f32 %v2157, %v2644
      %v2678 = vsub.f32 %v2158, %v2644
      %v2679 = vsub.f32 %v2159, %v2644
      %v2680 = vsub.f32 %v2160, %v2644
      %v2681 = vsub.f32 %v2161, %v2644
      %v2682 = vsub.f32 %v2162, %v2644
      %v2683 = vsub.f32 %v2163, %v2644
      %v2684 = vsub.f32 %v2164, %v2644
      %v2685 = vsub.f32 %v2165, %v2644
      %v2686 = vsub.f32 %v2166, %v2644
      %v2687 = vsub.f32 %v2167, %v2644
      %v2688 = vsub.f32 %v2168, %v2644
      %v2689 = vsub.f32 %v2169, %v2644
      %v2690 = vsub.f32 %v2170, %v2644
      %v2691 = vsub.f32 %v2171, %v2644
      %v2692 = vsub.f32 %v2172, %v2644
      %v2693 = vsub.f32 %v2173, %v2644
      %v2694 = vsub.f32 %v2174, %v2644
      %v2695 = vsub.f32 %v2175, %v2644
      %v2696 = vsub.f32 %v2176, %v2644
      %v2697 = vsub.f32 %v2177, %v2644
      %v2698 = vsub.f32 %v2178, %v2644
      %v2699 = vsub.f32 %v2179, %v2644
      %v2700 = vsub.f32 %v2180, %v2644
      %v2701 = vsub.f32 %v2181, %v2644
      %v2702 = vsub.f32 %v2182, %v2644
      %v2703 = vsub.f32 %v2183, %v2644
      %v2704 = vsub.f32 %v2184, %v2644
      %v2705 = vsub.f32 %v2185, %v2644
      %v2706 = vsub.f32 %v2186, %v2644
      %v2707 = vsub.f32 %v2187, %v2644
      %v2708 = vsub.f32 %v2188, %v2644
      %v2709 = vmul.f32 %v2645, %v2645
      %v2710 = vmul.f32 %v2646, %v2646
      %v2711 = vmul.f32 %v2647, %v2647
      %v2712 = vmul.f32 %v2648, %v2648
      %v2713 = vmul.f32 %v2649, %v2649
      %v2714 = vmul.f32 %v2650, %v2650
      %v2715 = vmul.f32 %v2651, %v2651
      %v2716 = vmul.f32 %v2652, %v2652
      %v2717 = vmul.f32 %v2653, %v2653
      %v2718 = vmul.f32 %v2654, %v2654
      %v2719 = vmul.f32 %v2655, %v2655
      %v2720 = vmul.f32 %v2656, %v2656
      %v2721 = vmul.f32 %v2657, %v2657
      %v2722 = vmul.f32 %v2658, %v2658
      %v2723 = vmul.f32 %v2659, %v2659
      %v2724 = vmul.f32 %v2660, %v2660
      %v2725 = vmul.f32 %v2661, %v2661
      %v2726 = vmul.f32 %v2662, %v2662
      %v2727 = vmul.f32 %v2663, %v2663
      %v2728 = vmul.f32 %v2664, %v2664
      %v2729 = vmul.f32 %v2665, %v2665
      %v2730 = vmul.f32 %v2666, %v2666
      %v2731 = vmul.f32 %v2667, %v2667
      %v2732 = vmul.f32 %v2668, %v2668
      %v2733 = vmul.f32 %v2669, %v2669
      %v2734 = vmul.f32 %v2670, %v2670
      %v2735 = vmul.f32 %v2671, %v2671
      %v2736 = vmul.f32 %v2672, %v2672
      %v2737 = vmul.f32 %v2673, %v2673
      %v2738 = vmul.f32 %v2674, %v2674
      %v2739 = vmul.f32 %v2675, %v2675
      %v2740 = vmul.f32 %v2676, %v2676
      %v2741 = vmul.f32 %v2677, %v2677
      %v2742 = vmul.f32 %v2678, %v2678
      %v2743 = vmul.f32 %v2679, %v2679
      %v2744 = vmul.f32 %v2680, %v2680
      %v2745 = vmul.f32 %v2681, %v2681
      %v2746 = vmul.f32 %v2682, %v2682
      %v2747 = vmul.f32 %v2683, %v2683
      %v2748 = vmul.f32 %v2684, %v2684
      %v2749 = vmul.f32 %v2685, %v2685
      %v2750 = vmul.f32 %v2686, %v2686
      %v2751 = vmul.f32 %v2687, %v2687
      %v2752 = vmul.f32 %v2688, %v2688
      %v2753 = vmul.f32 %v2689, %v2689
      %v2754 = vmul.f32 %v2690, %v2690
      %v2755 = vmul.f32 %v2691, %v2691
      %v2756 = vmul.f32 %v2692, %v2692
      %v2757 = vmul.f32 %v2693, %v2693
      %v2758 = vmul.f32 %v2694, %v2694
      %v2759 = vmul.f32 %v2695, %v2695
      %v2760 = vmul.f32 %v2696, %v2696
      %v2761 = vmul.f32 %v2697, %v2697
      %v2762 = vmul.f32 %v2698, %v2698
      %v2763 = vmul.f32 %v2699, %v2699
      %v2764 = vmul.f32 %v2700, %v2700
      %v2765 = vmul.f32 %v2701, %v2701
      %v2766 = vmul.f32 %v2702, %v2702
      %v2767 = vmul.f32 %v2703, %v2703
      %v2768 = vmul.f32 %v2704, %v2704
      %v2769 = vmul.f32 %v2705, %v2705
      %v2770 = vmul.f32 %v2706, %v2706
      %v2771 = vmul.f32 %v2707, %v2707
      %v2772 = vmul.f32 %v2708, %v2708
      %v2773 = vsel %vm2510, %v2709, 0.0
      %v2774 = vsel %vm2510, %v2710, 0.0
      %v2775 = vadd.f32 %v2773, %v2774
      %v2776 = vsel %vm2510, %v2711, 0.0
      %v2777 = vadd.f32 %v2775, %v2776
      %v2778 = vsel %vm2510, %v2712, 0.0
      %v2779 = vadd.f32 %v2777, %v2778
      %v2780 = vsel %vm2510, %v2713, 0.0
      %v2781 = vadd.f32 %v2779, %v2780
      %v2782 = vsel %vm2510, %v2714, 0.0
      %v2783 = vadd.f32 %v2781, %v2782
      %v2784 = vsel %vm2510, %v2715, 0.0
      %v2785 = vadd.f32 %v2783, %v2784
      %v2786 = vsel %vm2510, %v2716, 0.0
      %v2787 = vadd.f32 %v2785, %v2786
      %v2788 = vsel %vm2510, %v2717, 0.0
      %v2789 = vadd.f32 %v2787, %v2788
      %v2790 = vsel %vm2510, %v2718, 0.0
      %v2791 = vadd.f32 %v2789, %v2790
      %v2792 = vsel %vm2510, %v2719, 0.0
      %v2793 = vadd.f32 %v2791, %v2792
      %v2794 = vsel %vm2510, %v2720, 0.0
      %v2795 = vadd.f32 %v2793, %v2794
      %v2796 = vsel %vm2510, %v2721, 0.0
      %v2797 = vadd.f32 %v2795, %v2796
      %v2798 = vsel %vm2510, %v2722, 0.0
      %v2799 = vadd.f32 %v2797, %v2798
      %v2800 = vsel %vm2510, %v2723, 0.0
      %v2801 = vadd.f32 %v2799, %v2800
      %v2802 = vsel %vm2510, %v2724, 0.0
      %v2803 = vadd.f32 %v2801, %v2802
      %v2804 = vsel %vm2510, %v2725, 0.0
      %v2805 = vadd.f32 %v2803, %v2804
      %v2806 = vsel %vm2510, %v2726, 0.0
      %v2807 = vadd.f32 %v2805, %v2806
      %v2808 = vsel %vm2510, %v2727, 0.0
      %v2809 = vadd.f32 %v2807, %v2808
      %v2810 = vsel %vm2510, %v2728, 0.0
      %v2811 = vadd.f32 %v2809, %v2810
      %v2812 = vsel %vm2510, %v2729, 0.0
      %v2813 = vadd.f32 %v2811, %v2812
      %v2814 = vsel %vm2510, %v2730, 0.0
      %v2815 = vadd.f32 %v2813, %v2814
      %v2816 = vsel %vm2510, %v2731, 0.0
      %v2817 = vadd.f32 %v2815, %v2816
      %v2818 = vsel %vm2510, %v2732, 0.0
      %v2819 = vadd.f32 %v2817, %v2818
      %v2820 = vsel %vm2510, %v2733, 0.0
      %v2821 = vadd.f32 %v2819, %v2820
      %v2822 = vsel %vm2510, %v2734, 0.0
      %v2823 = vadd.f32 %v2821, %v2822
      %v2824 = vsel %vm2510, %v2735, 0.0
      %v2825 = vadd.f32 %v2823, %v2824
      %v2826 = vsel %vm2510, %v2736, 0.0
      %v2827 = vadd.f32 %v2825, %v2826
      %v2828 = vsel %vm2510, %v2737, 0.0
      %v2829 = vadd.f32 %v2827, %v2828
      %v2830 = vsel %vm2510, %v2738, 0.0
      %v2831 = vadd.f32 %v2829, %v2830
      %v2832 = vsel %vm2510, %v2739, 0.0
      %v2833 = vadd.f32 %v2831, %v2832
      %v2834 = vsel %vm2510, %v2740, 0.0
      %v2835 = vadd.f32 %v2833, %v2834
      %v2836 = vsel %vm2510, %v2741, 0.0
      %v2837 = vadd.f32 %v2835, %v2836
      %v2838 = vsel %vm2510, %v2742, 0.0
      %v2839 = vadd.f32 %v2837, %v2838
      %v2840 = vsel %vm2510, %v2743, 0.0
      %v2841 = vadd.f32 %v2839, %v2840
      %v2842 = vsel %vm2510, %v2744, 0.0
      %v2843 = vadd.f32 %v2841, %v2842
      %v2844 = vsel %vm2510, %v2745, 0.0
      %v2845 = vadd.f32 %v2843, %v2844
      %v2846 = vsel %vm2510, %v2746, 0.0
      %v2847 = vadd.f32 %v2845, %v2846
      %v2848 = vsel %vm2510, %v2747, 0.0
      %v2849 = vadd.f32 %v2847, %v2848
      %v2850 = vsel %vm2510, %v2748, 0.0
      %v2851 = vadd.f32 %v2849, %v2850
      %v2852 = vsel %vm2510, %v2749, 0.0
      %v2853 = vadd.f32 %v2851, %v2852
      %v2854 = vsel %vm2510, %v2750, 0.0
      %v2855 = vadd.f32 %v2853, %v2854
      %v2856 = vsel %vm2510, %v2751, 0.0
      %v2857 = vadd.f32 %v2855, %v2856
      %v2858 = vsel %vm2510, %v2752, 0.0
      %v2859 = vadd.f32 %v2857, %v2858
      %v2860 = vsel %vm2510, %v2753, 0.0
      %v2861 = vadd.f32 %v2859, %v2860
      %v2862 = vsel %vm2510, %v2754, 0.0
      %v2863 = vadd.f32 %v2861, %v2862
      %v2864 = vsel %vm2510, %v2755, 0.0
      %v2865 = vadd.f32 %v2863, %v2864
      %v2866 = vsel %vm2510, %v2756, 0.0
      %v2867 = vadd.f32 %v2865, %v2866
      %v2868 = vsel %vm2510, %v2757, 0.0
      %v2869 = vadd.f32 %v2867, %v2868
      %v2870 = vsel %vm2510, %v2758, 0.0
      %v2871 = vadd.f32 %v2869, %v2870
      %v2872 = vsel %vm2510, %v2759, 0.0
      %v2873 = vadd.f32 %v2871, %v2872
      %v2874 = vsel %vm2510, %v2760, 0.0
      %v2875 = vadd.f32 %v2873, %v2874
      %v2876 = vsel %vm2510, %v2761, 0.0
      %v2877 = vadd.f32 %v2875, %v2876
      %v2878 = vsel %vm2510, %v2762, 0.0
      %v2879 = vadd.f32 %v2877, %v2878
      %v2880 = vsel %vm2510, %v2763, 0.0
      %v2881 = vadd.f32 %v2879, %v2880
      %v2882 = vsel %vm2510, %v2764, 0.0
      %v2883 = vadd.f32 %v2881, %v2882
      %v2884 = vsel %vm2510, %v2765, 0.0
      %v2885 = vadd.f32 %v2883, %v2884
      %v2886 = vsel %vm2510, %v2766, 0.0
      %v2887 = vadd.f32 %v2885, %v2886
      %v2888 = vsel %vm2510, %v2767, 0.0
      %v2889 = vadd.f32 %v2887, %v2888
      %v2890 = vsel %vm2510, %v2768, 0.0
      %v2891 = vadd.f32 %v2889, %v2890
      %v2892 = vsel %vm2510, %v2769, 0.0
      %v2893 = vadd.f32 %v2891, %v2892
      %v2894 = vsel %vm2510, %v2770, 0.0
      %v2895 = vadd.f32 %v2893, %v2894
      %v2896 = vsel %vm2510, %v2771, 0.0
      %v2897 = vadd.f32 %v2895, %v2896
      %v2898 = vsel %vm2510, %v2772, 0.0
      %v2899 = vadd.f32 %v2897, %v2898
      %v2900 = vrot.slane %v2899, 4
      %v2901 = vadd.f32 %v2899, %v2900
      %v2902 = vrot.slane %v2901, 2
      %v2903 = vadd.f32 %v2901, %v2902
      %v2904 = vrot.slane %v2903, 1
      %v2905 = vadd.f32 %v2903, %v2904
      %vm2906 = vcmask 1040384
      %v2907 = vsel %vm2906, %v2644, %v2905
      %vm2908 = vcmask 123904
      %2909 = vst.msk [vmem:[%s221] sm:$0x3] %vm2908, %v2907
      %s2910 = sadd.s32 %s19, %s20
      %s2911 = smul.u32 64, %s2910
      %p2912 = scmp.lt.s32.totalorder %s2911, 127
      %s2913 = scalar_select %p2912, %s2911, 127
      %s2914 = smul.addr %s2913, 4
      %s2915 = scalar_lea.vmem %s2, %s2914
      %p2916 = scmp.lt.s32.totalorder %s19, 1
      %s2917 = scalar_select %p2916, %s19, 1
      %p2918 = scmp.lt.s32.totalorder %s20, 0
      %s2919 = scalar_select %p2918, %s20, 0
      %s2920 = sadd.s32 %s2919, %s2917
      %s2921 = smul.addr %s2920, 2
      %s2922 = scalar_lea.vmem %s3, %s2921
      // Predicated region
      $region29: #{conv_block_pallas.1} parent=27 // pred_check
        %p2923 = pneg %p96
      $region30: #{conv_block_pallas.1} parent=27 // pred_check_branch
        %2925 = sbr.rel (%p2923) target = $region32
      $region31: #{conv_block_pallas.1} parent=27 // pred_region
        %s2926 = sadd.s32 %s19, %s20
        %s2927 = smul.u32 64, %s2926
      $region32: #{conv_block_pallas.1} parent=27 // pred_fallthru
        _
      // Predicated region
      $region33: #{conv_block_pallas.1} parent=27 // pred_check
        %p2928 = pneg %p124
      $region34: #{conv_block_pallas.1} parent=27 // pred_check_branch
        %2930 = sbr.rel (%p2928) target = $region36
      $region35: #{conv_block_pallas.1} parent=27 // pred_region
        _
      $region36: #{conv_block_pallas.1} parent=27 // pred_fallthru
        _
    $region28: #{conv_block_pallas.1} parent=5 // pred_fallthru
      _
    %p2931 = scmp.le.s32.totalorder 2, %s10
    // Predicated region
    $region37: #{conv_block_pallas.1} parent=5 // pred_check
      %p2932 = pneg %p2931
    $region38: #{conv_block_pallas.1} parent=5 // pred_check_branch
      %2934 = sbr.rel (%p2932) target = $region40
    $region39: #{conv_block_pallas.1} parent=5 // pred_region
      %s2935 = ssub.s32 %s10, 2
      // Predicated region
      $region41: #{conv_block_pallas.1} parent=39 // pred_check
        %p2936 = pneg %p102
      $region42: #{conv_block_pallas.1} parent=39 // pred_check_branch
        %2938 = sbr.rel (%p2936) target = $region44
      $region43: #{conv_block_pallas.1} parent=39 // pred_region
        %s2939 = sadd.s32 %s21, %s22
        %s2940 = smul.u32 64, %s2939
        %p2941 = scmp.lt.s32.totalorder %s2940, 127
        %s2942 = scalar_select %p2941, %s2940, 127
        %s2943 = smul.addr %s2942, 4
        %s2944 = scalar_lea.vmem %s2, %s2943
      $region44: #{conv_block_pallas.1} parent=39 // pred_fallthru
        _
      // Predicated region
      $region45: #{conv_block_pallas.1} parent=39 // pred_check
        %p2945 = pneg %p130
      $region46: #{conv_block_pallas.1} parent=39 // pred_check_branch
        %2947 = sbr.rel (%p2945) target = $region48
      $region47: #{conv_block_pallas.1} parent=39 // pred_region
        %p2948 = scmp.lt.s32.totalorder %s21, 1
        %s2949 = scalar_select %p2948, %s21, 1
        %p2950 = scmp.lt.s32.totalorder %s22, 0
        %s2951 = scalar_select %p2950, %s22, 0
        %s2952 = sadd.s32 %s2951, %s2949
        %s2953 = smul.addr %s2952, 2
        %s2954 = scalar_lea.vmem %s3, %s2953
      $region48: #{conv_block_pallas.1} parent=39 // pred_fallthru
        _
    $region40: #{conv_block_pallas.1} parent=5 // pred_fallthru
      _
  $region6: #{conv_block_pallas.1} parent=0 // loop_footer
    %s14 = sadd.s32 1, %s10
  $region7: #{conv_block_pallas.1} parent=0 // loop_footer_branch
    %9 = sbr.rel target = $region3
  $region8: #{conv_block_pallas.1} parent=0 // loop_exit
    _

</llo_original>
